<compile_context>
chip_gen: v5e
topology: v5e:2x2
jax: 0.10.0
libtpu: 0.0.40
codegen_flags: <defaults>
</compile_context>

<pallas_src>
import functools

import jax
import jax.numpy as jnp
from jax.experimental import pallas as pl
from jax.experimental.pallas import tpu as pltpu


def _round_up(x, m):
    return (x + m - 1) // m * m


def _detect_num_tensorcores():
    """2 for dual-TensorCore chips (v7x, v4/v5p megacore), else 1."""
    try:
        kind = jax.devices()[0].device_kind.lower()
    except Exception:
        return 1
    if any(tag in kind for tag in ("v7", "v4", "v5p")):
        return 2
    return 1


_NUM_TC = _detect_num_tensorcores()


def _critic_kernel(s_ref, a_ref, w1s_ref, w1a_ref, b1_ref, w2_ref, b2_ref,
                   w3_ref, b3_ref, out_ref):
    """One batch tile of the Critic forward, fully VMEM-resident."""
    # fc1: fc1_state on the MXU in f32 (tiny K, exact); fc1_action has
    # in_features == 1, so it is the VPU outer product a * w1a_row.  The two
    # biases are pre-summed (b1s + b1a) at pack time.
    h1 = jnp.dot(s_ref[...], w1s_ref[...], preferred_element_type=jnp.float32)
    h1 = h1 + a_ref[...] * w1a_ref[...] + b1_ref[...]
    h1 = jnp.maximum(h1, 0.0)                                   # f32 (TM, H1P)

    # fc2: bf16 MXU matmul, f32 accumulation; bias / ReLU on the f32 accumulator.
    h2 = jnp.dot(h1.astype(jnp.bfloat16), w2_ref[...],
                 preferred_element_type=jnp.float32)
    h2 = jnp.maximum(h2 + b2_ref[...], 0.0)                     # f32 (TM, H2P)

    # fc3 on the MXU: w3 lives in column 0 of an (H2P, 128) block, so the MXU
    # emits the lane-dense (TM, 128) result directly (no XLU reduce, no lane
    # broadcast).  b3 is the scalar bias replicated across 128 lanes; the
    # wrapper slices lane 0 back out.
    q = jnp.dot(h2.astype(jnp.bfloat16), w3_ref[...],
                preferred_element_type=jnp.float32)
    out_ref[...] = (q + b3_ref[...]).astype(out_ref.dtype)


@functools.partial(jax.jit, static_argnames=("num_tc",))
def _critic_forward(s, a, packed, num_tc):
    b = s.shape[0]
    # Pad batch to num_tc equal tiles whose rows are a sublane (8) multiple;
    # padded rows are sliced away at the end.
    bp = _round_up(b, 8 * num_tc)
    if bp != b:
        s = jnp.pad(s, ((0, bp - b), (0, 0)))
        a = jnp.pad(a, ((0, bp - b), (0, 0)))
    tile_m = bp // num_tc

    w1s, w1a, b1 = packed["w1s"], packed["w1a"], packed["b1"]
    w2, b2 = packed["w2"], packed["b2"]
    w3, b3 = packed["w3"], packed["b3"]
    n_state = w1s.shape[0]
    h1p = w1s.shape[1]
    h2p = w2.shape[1]
    out_lanes = b3.shape[1]

    flops = 2 * bp * (n_state * h1p + h1p + h1p * h2p + h2p * out_lanes)
    bytes_accessed = ((s.size + a.size) * 4
                      + (w1s.size + w1a.size + b1.size + b2.size + b3.size) * 4
                      + (w2.size + w3.size) * 2
                      + bp * out_lanes * 4)

    out = pl.pallas_call(
        _critic_kernel,
        out_shape=jax.ShapeDtypeStruct((bp, out_lanes), jnp.float32),
        grid=(num_tc,),
        in_specs=[
            pl.BlockSpec((tile_m, n_state), lambda i: (i, 0)),   # s batch tile
            pl.BlockSpec((tile_m, 1), lambda i: (i, 0)),         # a batch tile
            pl.BlockSpec((n_state, h1p), lambda i: (0, 0)),      # W1_state (f32)
            pl.BlockSpec((1, h1p), lambda i: (0, 0)),            # W1_action row
            pl.BlockSpec((1, h1p), lambda i: (0, 0)),            # b1 = b1s + b1a
            pl.BlockSpec((h1p, h2p), lambda i: (0, 0)),          # W2 (bf16)
            pl.BlockSpec((1, h2p), lambda i: (0, 0)),            # b2
            pl.BlockSpec((h2p, out_lanes), lambda i: (0, 0)),    # W3 column-packed
            pl.BlockSpec((1, out_lanes), lambda i: (0, 0)),      # b3 replicated
        ],
        out_specs=pl.BlockSpec((tile_m, out_lanes), lambda i: (i, 0)),
        compiler_params=pltpu.CompilerParams(
            dimension_semantics=("parallel",)),
        cost_estimate=pl.CostEstimate(
            flops=flops, transcendentals=0, bytes_accessed=bytes_accessed),
    )(s, a, w1s, w1a, b1, w2, b2, w3, b3)

    return out[:b, :1]


def critic_forward(s, a, packed, num_tc=None):
    """s: (B, n_state) f32, a: (B, 1) f32, packed: dict from pack_critic_params.

    NOTE: if the consumer can accept the padded lane-dense (bp, 128) kernel
    output directly, return it before the [:b, :1] slice to save one more
    wrapper-side XLA op.
    """
    if num_tc is None:
        num_tc = _NUM_TC
    return _critic_forward(s, a, packed, num_tc=num_tc)


def init_critic_params(key, n_state, n_action, hidden1=400, hidden2=300):
    """Raw f32 params mimicking nn.Linear default init (+-1/sqrt(fan_in)).

    Weights stored transposed: (in_features, out_features). Biases: (1, out).
    NOTE: matching the PyTorch module, fc1_action has in_features == 1
    regardless of n_action.
    """
    def linear(key, fan_in, fan_out):
        kw, kb = jax.random.split(key)
        bound = 1.0 / jnp.sqrt(jnp.float32(fan_in))
        w = jax.random.uniform(kw, (fan_in, fan_out), jnp.float32, -bound, bound)
        b = jax.random.uniform(kb, (1, fan_out), jnp.float32, -bound, bound)
        return w, b

    k1, k2, k3, k4 = jax.random.split(key, 4)
    w1s, b1s = linear(k1, n_state, hidden1)   # fc1_state
    w1a, b1a = linear(k2, 1, hidden1)         # fc1_action (in_features = 1)
    w2, b2 = linear(k3, hidden1, hidden2)     # fc2
    w3, b3 = linear(k4, hidden2, 1)           # fc3
    return dict(w1s=w1s, b1s=b1s, w1a=w1a, b1a=b1a, w2=w2, b2=b2, w3=w3, b3=b3)


def pack_critic_params(p, *, lane=128, out_lanes=128):
    """Zero-pad / fuse / cast raw params for the kernel (done once, offline)."""
    n_state, hidden1 = p["w1s"].shape
    hidden2 = p["w2"].shape[1]
    h1p = _round_up(hidden1, lane)
    h2p = _round_up(hidden2, lane)

    # fc1: kept in f32 (exact), hidden1 zero-padded to H1P, biases pre-summed.
    w1s = jnp.pad(p["w1s"], ((0, 0), (0, h1p - hidden1)))        # (n_state, H1P)
    w1a = jnp.pad(p["w1a"], ((0, 0), (0, h1p - hidden1)))        # (1, H1P)
    b1 = jnp.pad(p["b1s"] + p["b1a"], ((0, 0), (0, h1p - hidden1)))

    # fc2: bf16 weights (f32 accumulation in-kernel), zero-padded both dims.
    w2 = jnp.pad(p["w2"],
                 ((0, h1p - hidden1), (0, h2p - hidden2))).astype(jnp.bfloat16)
    b2 = jnp.pad(p["b2"], ((0, 0), (0, h2p - hidden2)))          # f32

    # fc3: weight column-packed into lane 0 of an (H2P, out_lanes) bf16 block so
    # the MXU produces a lane-dense (TM, out_lanes) result directly.
    w3 = jnp.pad(p["w3"],
                 ((0, h2p - hidden2), (0, out_lanes - 1))).astype(jnp.bfloat16)
    b3 = jnp.broadcast_to(p["b3"], (1, out_lanes)).astype(jnp.float32)

    return dict(w1s=w1s, w1a=w1a, b1=b1, w2=w2, b2=b2, w3=w3, b3=b3)


def critic_reference(s, a, p):
    """Pure-JAX f32 reference matching the PyTorch module exactly."""
    h1 = jnp.maximum(s @ p["w1s"] + p["b1s"] + a @ p["w1a"] + p["b1a"], 0.0)
    h2 = jnp.maximum(h1 @ p["w2"] + p["b2"], 0.0)
    return h2 @ p["w3"] + p["b3"]


if __name__ == "__main__":
    # Module-consistent sizes: n_state=16, action dim 1, hidden 400/300 (the
    # module defaults).  Batch 64 is small but already a multiple of 8 * 2, so
    # no batch padding occurs on either single- or dual-TensorCore chips.
    n_state, n_action = 16, 1
    hidden1, hidden2 = 400, 300
    batch = 64

    key = jax.random.PRNGKey(0)
    kp, ks, ka = jax.random.split(key, 3)

    raw = init_critic_params(kp, n_state, n_action, hidden1, hidden2)
    packed = pack_critic_params(raw)

    s = jax.random.normal(ks, (batch, n_state), jnp.float32)
    a = jax.random.normal(ka, (batch, 1), jnp.float32)

    out = jax.block_until_ready(critic_forward(s, a, packed))
    ref = critic_reference(s, a, raw)

    assert out.shape == (batch, 1), out.shape
    # fc1 is exact f32; fc2/fc3 use bf16 MXU inputs with f32 accumulation, so
    # compare against the pure-f32 reference with a correspondingly relaxed tol.
    max_err = float(jnp.max(jnp.abs(out - ref)))
    assert jnp.allclose(out, ref, atol=2e-2, rtol=2e-2), max_err

    print("KERNEL_OK")
</pallas_src>

<mosaic_0001>
module attributes {stable_mosaic.version = 11 : i64} {
  func.func @_critic_kernel(%arg0: i32, %arg1: memref<64x16xf32, #tpu.memory_space<vmem>>, %arg2: memref<64x1xf32, #tpu.memory_space<vmem>>, %arg3: memref<16x512xf32, #tpu.memory_space<vmem>>, %arg4: memref<1x512xf32, #tpu.memory_space<vmem>>, %arg5: memref<1x512xf32, #tpu.memory_space<vmem>>, %arg6: memref<512x384xbf16, #tpu.memory_space<vmem>>, %arg7: memref<1x384xf32, #tpu.memory_space<vmem>>, %arg8: memref<384x128xbf16, #tpu.memory_space<vmem>>, %arg9: memref<1x128xf32, #tpu.memory_space<vmem>>, %arg10: memref<64x128xf32, #tpu.memory_space<vmem>>) attributes {dimension_semantics = [#tpu.dimension_semantics<parallel>], iteration_bounds = array<i64: 1>, scalar_prefetch = 0 : i64, scratch_operands = 0 : i64, tpu.core_type = #tpu.core_type<tc>, window_params = [{transform_indices = @transform_0, window_bounds = array<i64: 64, 16>}, {transform_indices = @transform_1, window_bounds = array<i64: 64, 1>}, {pipeline_mode = #tpu.pipeline_mode<synchronous>, transform_indices = @transform_2, window_bounds = array<i64: 16, 512>}, {pipeline_mode = #tpu.pipeline_mode<synchronous>, transform_indices = @transform_3, window_bounds = array<i64: 1, 512>}, {pipeline_mode = #tpu.pipeline_mode<synchronous>, transform_indices = @transform_4, window_bounds = array<i64: 1, 512>}, {pipeline_mode = #tpu.pipeline_mode<synchronous>, transform_indices = @transform_5, window_bounds = array<i64: 512, 384>}, {pipeline_mode = #tpu.pipeline_mode<synchronous>, transform_indices = @transform_6, window_bounds = array<i64: 1, 384>}, {pipeline_mode = #tpu.pipeline_mode<synchronous>, transform_indices = @transform_7, window_bounds = array<i64: 384, 128>}, {pipeline_mode = #tpu.pipeline_mode<synchronous>, transform_indices = @transform_8, window_bounds = array<i64: 1, 128>}, {transform_indices = @transform_9, window_bounds = array<i64: 64, 128>}]} {
    %c0 = arith.constant 0 : index
    %c0_0 = arith.constant 0 : index
    %0 = vector.load %arg1[%c0, %c0_0] : memref<64x16xf32, #tpu.memory_space<vmem>>, vector<64x16xf32>
    %c0_1 = arith.constant 0 : index
    %c0_2 = arith.constant 0 : index
    %1 = vector.load %arg3[%c0_1, %c0_2] : memref<16x512xf32, #tpu.memory_space<vmem>>, vector<16x512xf32>
    %cst = arith.constant dense<0.000000e+00> : vector<64x512xf32>
    %2 = tpu.matmul %0, %1, %cst {dimension_numbers = #tpu.dot_dimension_numbers<[1], [0], [0], [1], [0, 0, 1, 1], [], []>} : vector<64x16xf32>, vector<16x512xf32>, vector<64x512xf32> -> vector<64x512xf32>
    %c0_3 = arith.constant 0 : index
    %c0_4 = arith.constant 0 : index
    %3 = vector.load %arg2[%c0_3, %c0_4] : memref<64x1xf32, #tpu.memory_space<vmem>>, vector<64x1xf32>
    %c0_5 = arith.constant 0 : index
    %c0_6 = arith.constant 0 : index
    %4 = vector.load %arg4[%c0_5, %c0_6] : memref<1x512xf32, #tpu.memory_space<vmem>>, vector<1x512xf32>
    %5 = vector.broadcast %3 : vector<64x1xf32> to vector<64x512xf32>
    %6 = vector.broadcast %4 : vector<1x512xf32> to vector<64x512xf32>
    %7 = arith.mulf %5, %6 : vector<64x512xf32>
    %8 = arith.addf %2, %7 : vector<64x512xf32>
    %c0_7 = arith.constant 0 : index
    %c0_8 = arith.constant 0 : index
    %9 = vector.load %arg5[%c0_7, %c0_8] : memref<1x512xf32, #tpu.memory_space<vmem>>, vector<1x512xf32>
    %10 = vector.broadcast %9 : vector<1x512xf32> to vector<64x512xf32>
    %11 = arith.addf %8, %10 : vector<64x512xf32>
    %cst_9 = arith.constant 0.000000e+00 : f32
    %12 = vector.broadcast %cst_9 : f32 to vector<64x512xf32>
    %13 = arith.maximumf %11, %12 : vector<64x512xf32>
    %14 = arith.truncf %13 : vector<64x512xf32> to vector<64x512xbf16>
    %c0_10 = arith.constant 0 : index
    %c0_11 = arith.constant 0 : index
    %15 = vector.load %arg6[%c0_10, %c0_11] : memref<512x384xbf16, #tpu.memory_space<vmem>>, vector<512x384xbf16>
    %cst_12 = arith.constant dense<0.000000e+00> : vector<64x384xf32>
    %16 = tpu.matmul %14, %15, %cst_12 {dimension_numbers = #tpu.dot_dimension_numbers<[1], [0], [0], [1], [0, 0, 1, 1], [], []>} : vector<64x512xbf16>, vector<512x384xbf16>, vector<64x384xf32> -> vector<64x384xf32>
    %c0_13 = arith.constant 0 : index
    %c0_14 = arith.constant 0 : index
    %17 = vector.load %arg7[%c0_13, %c0_14] : memref<1x384xf32, #tpu.memory_space<vmem>>, vector<1x384xf32>
    %18 = vector.broadcast %17 : vector<1x384xf32> to vector<64x384xf32>
    %19 = arith.addf %16, %18 : vector<64x384xf32>
    %cst_15 = arith.constant 0.000000e+00 : f32
    %20 = vector.broadcast %cst_15 : f32 to vector<64x384xf32>
    %21 = arith.maximumf %19, %20 : vector<64x384xf32>
    %22 = arith.truncf %21 : vector<64x384xf32> to vector<64x384xbf16>
    %c0_16 = arith.constant 0 : index
    %c0_17 = arith.constant 0 : index
    %23 = vector.load %arg8[%c0_16, %c0_17] : memref<384x128xbf16, #tpu.memory_space<vmem>>, vector<384x128xbf16>
    %cst_18 = arith.constant dense<0.000000e+00> : vector<64x128xf32>
    %24 = tpu.matmul %22, %23, %cst_18 {dimension_numbers = #tpu.dot_dimension_numbers<[1], [0], [0], [1], [0, 0, 1, 1], [], []>} : vector<64x384xbf16>, vector<384x128xbf16>, vector<64x128xf32> -> vector<64x128xf32>
    %c0_19 = arith.constant 0 : index
    %c0_20 = arith.constant 0 : index
    %25 = vector.load %arg9[%c0_19, %c0_20] : memref<1x128xf32, #tpu.memory_space<vmem>>, vector<1x128xf32>
    %26 = vector.broadcast %25 : vector<1x128xf32> to vector<64x128xf32>
    %27 = arith.addf %24, %26 : vector<64x128xf32>
    %c0_21 = arith.constant 0 : index
    %c0_22 = arith.constant 0 : index
    %28 = vector.load %arg10[%c0_21, %c0_22] : memref<64x128xf32, #tpu.memory_space<vmem>>, vector<64x128xf32>
    tpu.vector_store %arg10[%c0_21, %c0_22], %27 {strides = array<i32>} : memref<64x128xf32, #tpu.memory_space<vmem>>, vector<64x128xf32>,
    return
  }
  func.func @transform_0(%arg0: i32) -> (i32, i32) {
    %c0_i32 = arith.constant 0 : i32
    %c0_i32_0 = arith.constant 0 : i32
    return %arg0, %c0_i32 : i32, i32
  }
  func.func @transform_1(%arg0: i32) -> (i32, i32) {
    %c0_i32 = arith.constant 0 : i32
    %c0_i32_0 = arith.constant 0 : i32
    return %arg0, %c0_i32 : i32, i32
  }
  func.func @transform_2(%arg0: i32) -> (i32, i32) {
    %c0_i32 = arith.constant 0 : i32
    %c0_i32_0 = arith.constant 0 : i32
    %c0_i32_1 = arith.constant 0 : i32
    return %c0_i32, %c0_i32_0 : i32, i32
  }
  func.func @transform_3(%arg0: i32) -> (i32, i32) {
    %c0_i32 = arith.constant 0 : i32
    %c0_i32_0 = arith.constant 0 : i32
    %c0_i32_1 = arith.constant 0 : i32
    return %c0_i32, %c0_i32_0 : i32, i32
  }
  func.func @transform_4(%arg0: i32) -> (i32, i32) {
    %c0_i32 = arith.constant 0 : i32
    %c0_i32_0 = arith.constant 0 : i32
    %c0_i32_1 = arith.constant 0 : i32
    return %c0_i32, %c0_i32_0 : i32, i32
  }
  func.func @transform_5(%arg0: i32) -> (i32, i32) {
    %c0_i32 = arith.constant 0 : i32
    %c0_i32_0 = arith.constant 0 : i32
    %c0_i32_1 = arith.constant 0 : i32
    return %c0_i32, %c0_i32_0 : i32, i32
  }
  func.func @transform_6(%arg0: i32) -> (i32, i32) {
    %c0_i32 = arith.constant 0 : i32
    %c0_i32_0 = arith.constant 0 : i32
    %c0_i32_1 = arith.constant 0 : i32
    return %c0_i32, %c0_i32_0 : i32, i32
  }
  func.func @transform_7(%arg0: i32) -> (i32, i32) {
    %c0_i32 = arith.constant 0 : i32
    %c0_i32_0 = arith.constant 0 : i32
    %c0_i32_1 = arith.constant 0 : i32
    return %c0_i32, %c0_i32_0 : i32, i32
  }
  func.func @transform_8(%arg0: i32) -> (i32, i32) {
    %c0_i32 = arith.constant 0 : i32
    %c0_i32_0 = arith.constant 0 : i32
    %c0_i32_1 = arith.constant 0 : i32
    return %c0_i32, %c0_i32_0 : i32, i32
  }
  func.func @transform_9(%arg0: i32) -> (i32, i32) {
    %c0_i32 = arith.constant 0 : i32
    %c0_i32_0 = arith.constant 0 : i32
    return %arg0, %c0_i32 : i32, i32
  }
}

</mosaic_0001>

<llo_original>
// kernel: _critic_forward.1
$region0: #{_critic_forward.1}
  #allocation0 [shape = 'u32[]', space=smem, size = 0x4, offset = 0x4, fixed_abs, tag = 'smem constant byte address 0x4 - core index']
  #allocation1 [shape = 'u32[72,128]{1,0:T(1,128)}', space=vmem, size = 0x9000, scoped, tag = 'internal scratch']
  %s0 = inlined_call_operand.vmem [shape: f32[64,16], index: 0, kind: input, shape index: {}]
  %s1 = inlined_call_operand.vmem [shape: f32[64,1], index: 1, kind: input, shape index: {}]
  %s2 = inlined_call_operand.vmem [shape: f32[16,512], index: 2, kind: input, shape index: {}]
  %s3 = inlined_call_operand.vmem [shape: f32[1,512], index: 3, kind: input, shape index: {}]
  %s4 = inlined_call_operand.vmem [shape: f32[1,512], index: 4, kind: input, shape index: {}]
  %s5 = inlined_call_operand.hbm [shape: bf16[512,384], index: 5, kind: input, shape index: {}]
  %s6 = inlined_call_operand.vmem [shape: f32[1,384], index: 6, kind: input, shape index: {}]
  %s7 = inlined_call_operand.hbm [shape: bf16[384,128], index: 7, kind: input, shape index: {}]
  %s8 = inlined_call_operand.vmem [shape: f32[1,128], index: 8, kind: input, shape index: {}]
  %s9 = inlined_call_operand.vmem [shape: f32[64,128], index: 9, kind: output, shape index: {}]
  %s10 = sld [smem:[#allocation0]]
  $region54: #{_critic_forward.1} parent=0
    _
  %s12 = ssub.s32 1, %s10
  %s13 = scalar_select 0, %s12, %s10
  $region1: #{_critic_forward.1} parent=0
    #allocation2 [shape = 'u8[393216]{0}', space=vmem, size = 0x60000, scoped, tag = 'input window, operand 5, single buffered']
    #allocation3 [shape = 's32[1]{0}', space=sflag, size = 0x4, scoped, tag = 'scoped memory for _critic_forward.1']
    #allocation4 [shape = 'u8[98304]{0}', space=vmem, size = 0x18000, scoped, tag = 'input window, operand 7, single buffered']
    #allocation5 [shape = 's32[1]{0}', space=sflag, size = 0x4, scoped, tag = 'scoped memory for _critic_forward.1']
    %14 = vsyncpa [#allocation3], 0
    %15 = vsyncpa [#allocation5], 0
    // Predicated region
    $region2: #{_critic_forward.1} parent=1 // pred_check
      _
    $region3: #{_critic_forward.1} parent=1 // pred_check_branch
      %17 = sbr.rel (0) target = $region5
    $region4: #{_critic_forward.1} parent=1 // pred_region
      _
    $region5: #{_critic_forward.1} parent=1 // pred_fallthru
      _
    // Predicated region
    $region6: #{_critic_forward.1} parent=1 // pred_check
      _
    $region7: #{_critic_forward.1} parent=1 // pred_check_branch
      %19 = sbr.rel (0) target = $region9
    $region8: #{_critic_forward.1} parent=1 // pred_region
      _
    $region9: #{_critic_forward.1} parent=1 // pred_fallthru
      _
    // Predicated region
    $region10: #{_critic_forward.1} parent=1 // pred_check
      _
    $region11: #{_critic_forward.1} parent=1 // pred_check_branch
      %21 = sbr.rel (0) target = $region13
    $region12: #{_critic_forward.1} parent=1 // pred_region
      _
    $region13: #{_critic_forward.1} parent=1 // pred_fallthru
      _
    // Predicated region
    $region14: #{_critic_forward.1} parent=1 // pred_check
      _
    $region15: #{_critic_forward.1} parent=1 // pred_check_branch
      %23 = sbr.rel (0) target = $region17
    $region16: #{_critic_forward.1} parent=1 // pred_region
      _
    $region17: #{_critic_forward.1} parent=1 // pred_fallthru
      _
    // Predicated region
    $region18: #{_critic_forward.1} parent=1 // pred_check
      _
    $region19: #{_critic_forward.1} parent=1 // pred_check_branch
      %25 = sbr.rel (0) target = $region21
    $region20: #{_critic_forward.1} parent=1 // pred_region
      _
    $region21: #{_critic_forward.1} parent=1 // pred_fallthru
      _
    // Predicated region
    $region22: #{_critic_forward.1} parent=1 // pred_check
      _
    $region23: #{_critic_forward.1} parent=1 // pred_check_branch
      %27 = sbr.rel (0) target = $region25
    $region24: #{_critic_forward.1} parent=1 // pred_region
      %29 = vsyncadd [#allocation3], 0
      %s30 = sshll.u32 %s5, 4
      %s31 = int_to_ptr.hbm [resolvable:$true] %s30
      %s32 = sshll.u32 [#allocation2], 4
      %s33 = int_to_ptr.vmem [resolvable:$true] %s32
      %38 = dma.hbm_to_vmem [thread:$0]  %s31, 12288, %s33, [#allocation3], 192, 192, 12
    $region25: #{_critic_forward.1} parent=1 // pred_fallthru
      _
    // Predicated region
    $region26: #{_critic_forward.1} parent=1 // pred_check
      _
    $region27: #{_critic_forward.1} parent=1 // pred_check_branch
      %40 = sbr.rel (0) target = $region29
    $region28: #{_critic_forward.1} parent=1 // pred_region
      _
    $region29: #{_critic_forward.1} parent=1 // pred_fallthru
      _
    // Predicated region
    $region30: #{_critic_forward.1} parent=1 // pred_check
      _
    $region31: #{_critic_forward.1} parent=1 // pred_check_branch
      %42 = sbr.rel (0) target = $region33
    $region32: #{_critic_forward.1} parent=1 // pred_region
      %44 = vsyncadd [#allocation5], 0
      %s45 = sshll.u32 %s7, 4
      %s46 = int_to_ptr.hbm [resolvable:$true] %s45
      %s47 = sshll.u32 [#allocation4], 4
      %s48 = int_to_ptr.vmem [resolvable:$true] %s47
      %53 = dma.hbm_to_vmem [thread:$0]  %s46, 3072, %s48, [#allocation5], 64, 64, 4
    $region33: #{_critic_forward.1} parent=1 // pred_fallthru
      _
    // Predicated region
    $region34: #{_critic_forward.1} parent=1 // pred_check
      _
    $region35: #{_critic_forward.1} parent=1 // pred_check_branch
      %55 = sbr.rel (0) target = $region37
    $region36: #{_critic_forward.1} parent=1 // pred_region
      _
    $region37: #{_critic_forward.1} parent=1 // pred_fallthru
      _
    // Predicated region
    $region38: #{_critic_forward.1} parent=1 // pred_check
      _
    $region39: #{_critic_forward.1} parent=1 // pred_check_branch
      %57 = sbr.rel (0) target = $region41
    $region40: #{_critic_forward.1} parent=1 // pred_region
      %59 = dma.done [#allocation3], 12288
    $region41: #{_critic_forward.1} parent=1 // pred_fallthru
      _
    // Predicated region
    $region42: #{_critic_forward.1} parent=1 // pred_check
      _
    $region43: #{_critic_forward.1} parent=1 // pred_check_branch
      %61 = sbr.rel (0) target = $region45
    $region44: #{_critic_forward.1} parent=1 // pred_region
      %63 = dma.done [#allocation5], 3072
    $region45: #{_critic_forward.1} parent=1 // pred_fallthru
      _
    %v64 = vld [vmem:[%s0] sm:$0xff]
    %v65 = vld [vmem:[%s0 + $0x8] sm:$0xff]
    %v66 = vld [vmem:[%s0 + $0x10] sm:$0xff]
    %v67 = vld [vmem:[%s0 + $0x18] sm:$0xff]
    %v68 = vld [vmem:[%s0 + $0x20] sm:$0xff]
    %v69 = vld [vmem:[%s0 + $0x28] sm:$0xff]
    %v70 = vld [vmem:[%s0 + $0x30] sm:$0xff]
    %v71 = vld [vmem:[%s0 + $0x38] sm:$0xff]
    %v72 = vld [vmem:[%s2] sm:$0xff]
    %v73 = vld [vmem:[%s2 + $0x8] sm:$0xff]
    %v74 = vld [vmem:[%s2 + $0x10] sm:$0xff]
    %v75 = vld [vmem:[%s2 + $0x18] sm:$0xff]
    %v76 = vld [vmem:[%s2 + $0x20] sm:$0xff]
    %v77 = vld [vmem:[%s2 + $0x28] sm:$0xff]
    %v78 = vld [vmem:[%s2 + $0x30] sm:$0xff]
    %v79 = vld [vmem:[%s2 + $0x38] sm:$0xff]
    %v80 = vld [vmem:[%s1] sm:$0xff]
    %v81 = vld [vmem:[%s1 + $0x8] sm:$0xff]
    %v82 = vld [vmem:[%s1 + $0x10] sm:$0xff]
    %v83 = vld [vmem:[%s1 + $0x18] sm:$0xff]
    %v84 = vld [vmem:[%s1 + $0x20] sm:$0xff]
    %v85 = vld [vmem:[%s1 + $0x28] sm:$0xff]
    %v86 = vld [vmem:[%s1 + $0x30] sm:$0xff]
    %v87 = vld [vmem:[%s1 + $0x38] sm:$0xff]
    %v88 = vld [vmem:[%s3] sm:$0xf]
    %90 = vset.pattern.permute.xlu0 0
    %91 = vperm.xlu0 %90, %v80
    %v92 = vpop.permute.xlu0 %91
    %95 = vset.pattern.permute.xlu0 0
    %96 = vperm.xlu0 %95, %v81
    %v97 = vpop.permute.xlu0 %96
    %100 = vset.pattern.permute.xlu0 0
    %101 = vperm.xlu0 %100, %v82
    %v102 = vpop.permute.xlu0 %101
    %105 = vset.pattern.permute.xlu0 0
    %106 = vperm.xlu0 %105, %v83
    %v107 = vpop.permute.xlu0 %106
    %110 = vset.pattern.permute.xlu0 0
    %111 = vperm.xlu0 %110, %v84
    %v112 = vpop.permute.xlu0 %111
    %115 = vset.pattern.permute.xlu0 0
    %116 = vperm.xlu0 %115, %v85
    %v117 = vpop.permute.xlu0 %116
    %120 = vset.pattern.permute.xlu0 0
    %121 = vperm.xlu0 %120, %v86
    %v122 = vpop.permute.xlu0 %121
    %125 = vset.pattern.permute.xlu0 0
    %126 = vperm.xlu0 %125, %v87
    %v127 = vpop.permute.xlu0 %126
    %v130 = vperm.slane %v88, 0
    %v131 = vperm.slane %v88, 1
    %v132 = vperm.slane %v88, 2
    %v133 = vperm.slane %v88, 3
    %v138 = vmul.f32 %v92, %v130
    %v139 = vmul.f32 %v92, %v131
    %v140 = vmul.f32 %v92, %v132
    %v141 = vmul.f32 %v92, %v133
    %v142 = vmul.f32 %v97, %v130
    %v143 = vmul.f32 %v97, %v131
    %v144 = vmul.f32 %v97, %v132
    %v145 = vmul.f32 %v97, %v133
    %v146 = vmul.f32 %v102, %v130
    %v147 = vmul.f32 %v102, %v131
    %v148 = vmul.f32 %v102, %v132
    %v149 = vmul.f32 %v102, %v133
    %v150 = vmul.f32 %v107, %v130
    %v151 = vmul.f32 %v107, %v131
    %v152 = vmul.f32 %v107, %v132
    %v153 = vmul.f32 %v107, %v133
    %v154 = vmul.f32 %v112, %v130
    %v155 = vmul.f32 %v112, %v131
    %v156 = vmul.f32 %v112, %v132
    %v157 = vmul.f32 %v112, %v133
    %v158 = vmul.f32 %v117, %v130
    %v159 = vmul.f32 %v117, %v131
    %v160 = vmul.f32 %v117, %v132
    %v161 = vmul.f32 %v117, %v133
    %v162 = vmul.f32 %v122, %v130
    %v163 = vmul.f32 %v122, %v131
    %v164 = vmul.f32 %v122, %v132
    %v165 = vmul.f32 %v122, %v133
    %v166 = vmul.f32 %v127, %v130
    %v167 = vmul.f32 %v127, %v131
    %v168 = vmul.f32 %v127, %v132
    %v169 = vmul.f32 %v127, %v133
    %vm170 = vcmask 130048
    %v172 = vsel %vm170, %v64, 0
    %v175 = vsel %vm170, %v65, 0
    %v178 = vsel %vm170, %v66, 0
    %v181 = vsel %vm170, %v67, 0
    %v184 = vsel %vm170, %v68, 0
    %v187 = vsel %vm170, %v69, 0
    %v190 = vsel %vm170, %v70, 0
    %v193 = vsel %vm170, %v71, 0
    %195 = vmatpush.msra.mxu0 0.0
    %196 = vmatpush.msra.mxu0 0.0
    %197 = vmatpush.msra.mxu0 0.0
    %198 = vmatpush.msra.mxu0 0.0
    %199 = vmatpush.msra.mxu0 0.0
    %200 = vmatpush.msra.mxu0 0.0
    %201 = vmatpush.msra.mxu0 0.0
    %202 = vmatpush.msra.mxu0 0.0
    %203 = vmatpush.msra.mxu0 0.0
    %204 = vmatpush.msra.mxu0 0.0
    %205 = vmatpush.msra.mxu0 0.0
    %206 = vmatpush.msra.mxu0 0.0
    %207 = vmatpush.msra.mxu0 0.0
    %208 = vmatpush.msra.mxu0 0.0
    %209 = vmatpush.msra.mxu0 %v76
    %210 = vmatpush.msra.mxu0 %v72
    %211 = vmatmul.f32.gmra.mxu0 %v172
    %v212 = vpop.f32.mrf.mxu0
    %v213 = vadd.f32 %v138, %v212
    %214 = vmatmul.f32.gmra.mxu0 %v175
    %v215 = vpop.f32.mrf.mxu0
    %v216 = vadd.f32 %v142, %v215
    %217 = vmatmul.f32.gmra.mxu0 %v178
    %v218 = vpop.f32.mrf.mxu0
    %v219 = vadd.f32 %v146, %v218
    %220 = vmatmul.f32.gmra.mxu0 %v181
    %v221 = vpop.f32.mrf.mxu0
    %v222 = vadd.f32 %v150, %v221
    %223 = vmatmul.f32.gmra.mxu0 %v184
    %v224 = vpop.f32.mrf.mxu0
    %v225 = vadd.f32 %v154, %v224
    %226 = vmatmul.f32.gmra.mxu0 %v187
    %v227 = vpop.f32.mrf.mxu0
    %v228 = vadd.f32 %v158, %v227
    %229 = vmatmul.f32.gmra.mxu0 %v190
    %v230 = vpop.f32.mrf.mxu0
    %v231 = vadd.f32 %v162, %v230
    %232 = vmatmul.f32.gmra.mxu0 %v193
    %v233 = vpop.f32.mrf.mxu0
    %v234 = vadd.f32 %v166, %v233
    %235 = vdwg.mxu0
    %236 = vmatpush.msra.mxu0 0.0
    %237 = vmatpush.msra.mxu0 0.0
    %238 = vmatpush.msra.mxu0 0.0
    %239 = vmatpush.msra.mxu0 0.0
    %240 = vmatpush.msra.mxu0 0.0
    %241 = vmatpush.msra.mxu0 0.0
    %242 = vmatpush.msra.mxu0 0.0
    %243 = vmatpush.msra.mxu0 0.0
    %244 = vmatpush.msra.mxu0 0.0
    %245 = vmatpush.msra.mxu0 0.0
    %246 = vmatpush.msra.mxu0 0.0
    %247 = vmatpush.msra.mxu0 0.0
    %248 = vmatpush.msra.mxu0 0.0
    %249 = vmatpush.msra.mxu0 0.0
    %250 = vmatpush.msra.mxu0 %v77
    %251 = vmatpush.msra.mxu0 %v73
    %252 = vmatmul.f32.gmra.mxu0 %v172
    %v253 = vpop.f32.mrf.mxu0
    %v254 = vadd.f32 %v139, %v253
    %255 = vmatmul.f32.gmra.mxu0 %v175
    %v256 = vpop.f32.mrf.mxu0
    %v257 = vadd.f32 %v143, %v256
    %258 = vmatmul.f32.gmra.mxu0 %v178
    %v259 = vpop.f32.mrf.mxu0
    %v260 = vadd.f32 %v147, %v259
    %261 = vmatmul.f32.gmra.mxu0 %v181
    %v262 = vpop.f32.mrf.mxu0
    %v263 = vadd.f32 %v151, %v262
    %264 = vmatmul.f32.gmra.mxu0 %v184
    %v265 = vpop.f32.mrf.mxu0
    %v266 = vadd.f32 %v155, %v265
    %267 = vmatmul.f32.gmra.mxu0 %v187
    %v268 = vpop.f32.mrf.mxu0
    %v269 = vadd.f32 %v159, %v268
    %270 = vmatmul.f32.gmra.mxu0 %v190
    %v271 = vpop.f32.mrf.mxu0
    %v272 = vadd.f32 %v163, %v271
    %273 = vmatmul.f32.gmra.mxu0 %v193
    %v274 = vpop.f32.mrf.mxu0
    %v275 = vadd.f32 %v167, %v274
    %276 = vdwg.mxu0
    %277 = vmatpush.msra.mxu0 0.0
    %278 = vmatpush.msra.mxu0 0.0
    %279 = vmatpush.msra.mxu0 0.0
    %280 = vmatpush.msra.mxu0 0.0
    %281 = vmatpush.msra.mxu0 0.0
    %282 = vmatpush.msra.mxu0 0.0
    %283 = vmatpush.msra.mxu0 0.0
    %284 = vmatpush.msra.mxu0 0.0
    %285 = vmatpush.msra.mxu0 0.0
    %286 = vmatpush.msra.mxu0 0.0
    %287 = vmatpush.msra.mxu0 0.0
    %288 = vmatpush.msra.mxu0 0.0
    %289 = vmatpush.msra.mxu0 0.0
    %290 = vmatpush.msra.mxu0 0.0
    %291 = vmatpush.msra.mxu0 %v78
    %292 = vmatpush.msra.mxu0 %v74
    %293 = vmatmul.f32.gmra.mxu0 %v172
    %v294 = vpop.f32.mrf.mxu0
    %v295 = vadd.f32 %v140, %v294
    %296 = vmatmul.f32.gmra.mxu0 %v175
    %v297 = vpop.f32.mrf.mxu0
    %v298 = vadd.f32 %v144, %v297
    %299 = vmatmul.f32.gmra.mxu0 %v178
    %v300 = vpop.f32.mrf.mxu0
    %v301 = vadd.f32 %v148, %v300
    %302 = vmatmul.f32.gmra.mxu0 %v181
    %v303 = vpop.f32.mrf.mxu0
    %v304 = vadd.f32 %v152, %v303
    %305 = vmatmul.f32.gmra.mxu0 %v184
    %v306 = vpop.f32.mrf.mxu0
    %v307 = vadd.f32 %v156, %v306
    %308 = vmatmul.f32.gmra.mxu0 %v187
    %v309 = vpop.f32.mrf.mxu0
    %v310 = vadd.f32 %v160, %v309
    %311 = vmatmul.f32.gmra.mxu0 %v190
    %v312 = vpop.f32.mrf.mxu0
    %v313 = vadd.f32 %v164, %v312
    %314 = vmatmul.f32.gmra.mxu0 %v193
    %v315 = vpop.f32.mrf.mxu0
    %v316 = vadd.f32 %v168, %v315
    %317 = vdwg.mxu0
    %318 = vmatpush.msra.mxu0 0.0
    %319 = vmatpush.msra.mxu0 0.0
    %320 = vmatpush.msra.mxu0 0.0
    %321 = vmatpush.msra.mxu0 0.0
    %322 = vmatpush.msra.mxu0 0.0
    %323 = vmatpush.msra.mxu0 0.0
    %324 = vmatpush.msra.mxu0 0.0
    %325 = vmatpush.msra.mxu0 0.0
    %326 = vmatpush.msra.mxu0 0.0
    %327 = vmatpush.msra.mxu0 0.0
    %328 = vmatpush.msra.mxu0 0.0
    %329 = vmatpush.msra.mxu0 0.0
    %330 = vmatpush.msra.mxu0 0.0
    %331 = vmatpush.msra.mxu0 0.0
    %332 = vmatpush.msra.mxu0 %v79
    %333 = vmatpush.msra.mxu0 %v75
    %334 = vmatmul.f32.gmra.mxu0 %v172
    %v335 = vpop.f32.mrf.mxu0
    %v336 = vadd.f32 %v141, %v335
    %337 = vmatmul.f32.gmra.mxu0 %v175
    %v338 = vpop.f32.mrf.mxu0
    %v339 = vadd.f32 %v145, %v338
    %340 = vmatmul.f32.gmra.mxu0 %v178
    %v341 = vpop.f32.mrf.mxu0
    %v342 = vadd.f32 %v149, %v341
    %343 = vmatmul.f32.gmra.mxu0 %v181
    %v344 = vpop.f32.mrf.mxu0
    %v345 = vadd.f32 %v153, %v344
    %346 = vmatmul.f32.gmra.mxu0 %v184
    %v347 = vpop.f32.mrf.mxu0
    %v348 = vadd.f32 %v157, %v347
    %349 = vmatmul.f32.gmra.mxu0 %v187
    %v350 = vpop.f32.mrf.mxu0
    %v351 = vadd.f32 %v161, %v350
    %352 = vmatmul.f32.gmra.mxu0 %v190
    %v353 = vpop.f32.mrf.mxu0
    %v354 = vadd.f32 %v165, %v353
    %355 = vmatmul.f32.gmra.mxu0 %v193
    %v356 = vpop.f32.mrf.mxu0
    %v357 = vadd.f32 %v169, %v356
    %358 = vdwg.mxu0
    %v359 = vld [vmem:[%s4] sm:$0xf]
    %v361 = vperm.slane %v359, 0
    %v362 = vperm.slane %v359, 1
    %v363 = vperm.slane %v359, 2
    %v364 = vperm.slane %v359, 3
    %v369 = vadd.f32 %v213, %v361
    %v370 = vadd.f32 %v254, %v362
    %v371 = vadd.f32 %v295, %v363
    %v372 = vadd.f32 %v336, %v364
    %v373 = vadd.f32 %v216, %v361
    %v374 = vadd.f32 %v257, %v362
    %v375 = vadd.f32 %v298, %v363
    %v376 = vadd.f32 %v339, %v364
    %v377 = vadd.f32 %v219, %v361
    %v378 = vadd.f32 %v260, %v362
    %v379 = vadd.f32 %v301, %v363
    %v380 = vadd.f32 %v342, %v364
    %v381 = vadd.f32 %v222, %v361
    %v382 = vadd.f32 %v263, %v362
    %v383 = vadd.f32 %v304, %v363
    %v384 = vadd.f32 %v345, %v364
    %v385 = vadd.f32 %v225, %v361
    %v386 = vadd.f32 %v266, %v362
    %v387 = vadd.f32 %v307, %v363
    %v388 = vadd.f32 %v348, %v364
    %v389 = vadd.f32 %v228, %v361
    %v390 = vadd.f32 %v269, %v362
    %v391 = vadd.f32 %v310, %v363
    %v392 = vadd.f32 %v351, %v364
    %v393 = vadd.f32 %v231, %v361
    %v394 = vadd.f32 %v272, %v362
    %v395 = vadd.f32 %v313, %v363
    %v396 = vadd.f32 %v354, %v364
    %v397 = vadd.f32 %v234, %v361
    %v398 = vadd.f32 %v275, %v362
    %v399 = vadd.f32 %v316, %v363
    %v400 = vadd.f32 %v357, %v364
    %v401 = vmax.f32 %v369, 0.0
    %v402 = vmax.f32 %v370, 0.0
    %v403 = vmax.f32 %v371, 0.0
    %v404 = vmax.f32 %v372, 0.0
    %v405 = vmax.f32 %v373, 0.0
    %v406 = vmax.f32 %v374, 0.0
    %v407 = vmax.f32 %v375, 0.0
    %v408 = vmax.f32 %v376, 0.0
    %v409 = vmax.f32 %v377, 0.0
    %v410 = vmax.f32 %v378, 0.0
    %v411 = vmax.f32 %v379, 0.0
    %v412 = vmax.f32 %v380, 0.0
    %v413 = vmax.f32 %v381, 0.0
    %v414 = vmax.f32 %v382, 0.0
    %v415 = vmax.f32 %v383, 0.0
    %v416 = vmax.f32 %v384, 0.0
    %v417 = vmax.f32 %v385, 0.0
    %v418 = vmax.f32 %v386, 0.0
    %v419 = vmax.f32 %v387, 0.0
    %v420 = vmax.f32 %v388, 0.0
    %v421 = vmax.f32 %v389, 0.0
    %v422 = vmax.f32 %v390, 0.0
    %v423 = vmax.f32 %v391, 0.0
    %v424 = vmax.f32 %v392, 0.0
    %v425 = vmax.f32 %v393, 0.0
    %v426 = vmax.f32 %v394, 0.0
    %v427 = vmax.f32 %v395, 0.0
    %v428 = vmax.f32 %v396, 0.0
    %v429 = vmax.f32 %v397, 0.0
    %v430 = vmax.f32 %v398, 0.0
    %v431 = vmax.f32 %v399, 0.0
    %v432 = vmax.f32 %v400, 0.0
    %v433 = vpack.c.bf16 %v405, %v401
    %v434 = vpack.c.bf16 %v406, %v402
    %v435 = vpack.c.bf16 %v407, %v403
    %v436 = vpack.c.bf16 %v408, %v404
    %v437 = vpack.c.bf16 %v413, %v409
    %v438 = vpack.c.bf16 %v414, %v410
    %v439 = vpack.c.bf16 %v415, %v411
    %v440 = vpack.c.bf16 %v416, %v412
    %v441 = vpack.c.bf16 %v421, %v417
    %v442 = vpack.c.bf16 %v422, %v418
    %v443 = vpack.c.bf16 %v423, %v419
    %v444 = vpack.c.bf16 %v424, %v420
    %v445 = vpack.c.bf16 %v429, %v425
    %v446 = vpack.c.bf16 %v430, %v426
    %v447 = vpack.c.bf16 %v431, %v427
    %v448 = vpack.c.bf16 %v432, %v428
    %v449 = vld [vmem:[#allocation2] sm:$0xff]
    %v450 = vld [vmem:[#allocation2 + $0x8] sm:$0xf]
    %v451 = vld [vmem:[#allocation2 + $0xc] sm:$0xff]
    %v452 = vld [vmem:[#allocation2 + $0x14] sm:$0xf]
    %v453 = vld [vmem:[#allocation2 + $0x18] sm:$0xff]
    %v454 = vld [vmem:[#allocation2 + $0x20] sm:$0xf]
    %v455 = vld [vmem:[#allocation2 + $0x24] sm:$0xff]
    %v456 = vld [vmem:[#allocation2 + $0x2c] sm:$0xf]
    %v457 = vld [vmem:[#allocation2 + $0x30] sm:$0xff]
    %v458 = vld [vmem:[#allocation2 + $0x38] sm:$0xf]
    %v459 = vld [vmem:[#allocation2 + $0x3c] sm:$0xff]
    %v460 = vld [vmem:[#allocation2 + $0x44] sm:$0xf]
    %v461 = vld [vmem:[#allocation2 + $0x48] sm:$0xff]
    %v462 = vld [vmem:[#allocation2 + $0x50] sm:$0xf]
    %v463 = vld [vmem:[#allocation2 + $0x54] sm:$0xff]
    %v464 = vld [vmem:[#allocation2 + $0x5c] sm:$0xf]
    %v465 = vld [vmem:[#allocation2 + $0x60] sm:$0xff]
    %v466 = vld [vmem:[#allocation2 + $0x68] sm:$0xf]
    %v467 = vld [vmem:[#allocation2 + $0x6c] sm:$0xff]
    %v468 = vld [vmem:[#allocation2 + $0x74] sm:$0xf]
    %v469 = vld [vmem:[#allocation2 + $0x78] sm:$0xff]
    %v470 = vld [vmem:[#allocation2 + $0x80] sm:$0xf]
    %v471 = vld [vmem:[#allocation2 + $0x84] sm:$0xff]
    %v472 = vld [vmem:[#allocation2 + $0x8c] sm:$0xf]
    %v473 = vld [vmem:[#allocation2 + $0x90] sm:$0xff]
    %v474 = vld [vmem:[#allocation2 + $0x98] sm:$0xf]
    %v475 = vld [vmem:[#allocation2 + $0x9c] sm:$0xff]
    %v476 = vld [vmem:[#allocation2 + $0xa4] sm:$0xf]
    %v477 = vld [vmem:[#allocation2 + $0xa8] sm:$0xff]
    %v478 = vld [vmem:[#allocation2 + $0xb0] sm:$0xf]
    %v479 = vld [vmem:[#allocation2 + $0xb4] sm:$0xff]
    %v480 = vld [vmem:[#allocation2 + $0xbc] sm:$0xf]
    %v481 = vld [vmem:[#allocation2 + $0xc0] sm:$0xff]
    %v482 = vld [vmem:[#allocation2 + $0xc8] sm:$0xf]
    %v483 = vld [vmem:[#allocation2 + $0xcc] sm:$0xff]
    %v484 = vld [vmem:[#allocation2 + $0xd4] sm:$0xf]
    %v485 = vld [vmem:[#allocation2 + $0xd8] sm:$0xff]
    %v486 = vld [vmem:[#allocation2 + $0xe0] sm:$0xf]
    %v487 = vld [vmem:[#allocation2 + $0xe4] sm:$0xff]
    %v488 = vld [vmem:[#allocation2 + $0xec] sm:$0xf]
    %v489 = vld [vmem:[#allocation2 + $0xf0] sm:$0xff]
    %v490 = vld [vmem:[#allocation2 + $0xf8] sm:$0xf]
    %v491 = vld [vmem:[#allocation2 + $0xfc] sm:$0xff]
    %v492 = vld [vmem:[#allocation2 + $0x104] sm:$0xf]
    %v493 = vld [vmem:[#allocation2 + $0x108] sm:$0xff]
    %v494 = vld [vmem:[#allocation2 + $0x110] sm:$0xf]
    %v495 = vld [vmem:[#allocation2 + $0x114] sm:$0xff]
    %v496 = vld [vmem:[#allocation2 + $0x11c] sm:$0xf]
    %v497 = vld [vmem:[#allocation2 + $0x120] sm:$0xff]
    %v498 = vld [vmem:[#allocation2 + $0x128] sm:$0xf]
    %v499 = vld [vmem:[#allocation2 + $0x12c] sm:$0xff]
    %v500 = vld [vmem:[#allocation2 + $0x134] sm:$0xf]
    %v501 = vld [vmem:[#allocation2 + $0x138] sm:$0xff]
    %v502 = vld [vmem:[#allocation2 + $0x140] sm:$0xf]
    %v503 = vld [vmem:[#allocation2 + $0x144] sm:$0xff]
    %v504 = vld [vmem:[#allocation2 + $0x14c] sm:$0xf]
    %v505 = vld [vmem:[#allocation2 + $0x150] sm:$0xff]
    %v506 = vld [vmem:[#allocation2 + $0x158] sm:$0xf]
    %v507 = vld [vmem:[#allocation2 + $0x15c] sm:$0xff]
    %v508 = vld [vmem:[#allocation2 + $0x164] sm:$0xf]
    %v509 = vld [vmem:[#allocation2 + $0x168] sm:$0xff]
    %v510 = vld [vmem:[#allocation2 + $0x170] sm:$0xf]
    %v511 = vld [vmem:[#allocation2 + $0x174] sm:$0xff]
    %v512 = vld [vmem:[#allocation2 + $0x17c] sm:$0xf]
    %v513 = vld [vmem:[#allocation2 + $0x180] sm:$0xff]
    %v514 = vld [vmem:[#allocation2 + $0x188] sm:$0xf]
    %v515 = vld [vmem:[#allocation2 + $0x18c] sm:$0xff]
    %v516 = vld [vmem:[#allocation2 + $0x194] sm:$0xf]
    %v517 = vld [vmem:[#allocation2 + $0x198] sm:$0xff]
    %v518 = vld [vmem:[#allocation2 + $0x1a0] sm:$0xf]
    %v519 = vld [vmem:[#allocation2 + $0x1a4] sm:$0xff]
    %v520 = vld [vmem:[#allocation2 + $0x1ac] sm:$0xf]
    %v521 = vld [vmem:[#allocation2 + $0x1b0] sm:$0xff]
    %v522 = vld [vmem:[#allocation2 + $0x1b8] sm:$0xf]
    %v523 = vld [vmem:[#allocation2 + $0x1bc] sm:$0xff]
    %v524 = vld [vmem:[#allocation2 + $0x1c4] sm:$0xf]
    %v525 = vld [vmem:[#allocation2 + $0x1c8] sm:$0xff]
    %v526 = vld [vmem:[#allocation2 + $0x1d0] sm:$0xf]
    %v527 = vld [vmem:[#allocation2 + $0x1d4] sm:$0xff]
    %v528 = vld [vmem:[#allocation2 + $0x1dc] sm:$0xf]
    %v529 = vld [vmem:[#allocation2 + $0x1e0] sm:$0xff]
    %v530 = vld [vmem:[#allocation2 + $0x1e8] sm:$0xf]
    %v531 = vld [vmem:[#allocation2 + $0x1ec] sm:$0xff]
    %v532 = vld [vmem:[#allocation2 + $0x1f4] sm:$0xf]
    %v533 = vld [vmem:[#allocation2 + $0x1f8] sm:$0xff]
    %v534 = vld [vmem:[#allocation2 + $0x200] sm:$0xf]
    %v535 = vld [vmem:[#allocation2 + $0x204] sm:$0xff]
    %v536 = vld [vmem:[#allocation2 + $0x20c] sm:$0xf]
    %v537 = vld [vmem:[#allocation2 + $0x210] sm:$0xff]
    %v538 = vld [vmem:[#allocation2 + $0x218] sm:$0xf]
    %v539 = vld [vmem:[#allocation2 + $0x21c] sm:$0xff]
    %v540 = vld [vmem:[#allocation2 + $0x224] sm:$0xf]
    %v541 = vld [vmem:[#allocation2 + $0x228] sm:$0xff]
    %v542 = vld [vmem:[#allocation2 + $0x230] sm:$0xf]
    %v543 = vld [vmem:[#allocation2 + $0x234] sm:$0xff]
    %v544 = vld [vmem:[#allocation2 + $0x23c] sm:$0xf]
    %v545 = vld [vmem:[#allocation2 + $0x240] sm:$0xff]
    %v546 = vld [vmem:[#allocation2 + $0x248] sm:$0xf]
    %v547 = vld [vmem:[#allocation2 + $0x24c] sm:$0xff]
    %v548 = vld [vmem:[#allocation2 + $0x254] sm:$0xf]
    %v549 = vld [vmem:[#allocation2 + $0x258] sm:$0xff]
    %v550 = vld [vmem:[#allocation2 + $0x260] sm:$0xf]
    %v551 = vld [vmem:[#allocation2 + $0x264] sm:$0xff]
    %v552 = vld [vmem:[#allocation2 + $0x26c] sm:$0xf]
    %v553 = vld [vmem:[#allocation2 + $0x270] sm:$0xff]
    %v554 = vld [vmem:[#allocation2 + $0x278] sm:$0xf]
    %v555 = vld [vmem:[#allocation2 + $0x27c] sm:$0xff]
    %v556 = vld [vmem:[#allocation2 + $0x284] sm:$0xf]
    %v557 = vld [vmem:[#allocation2 + $0x288] sm:$0xff]
    %v558 = vld [vmem:[#allocation2 + $0x290] sm:$0xf]
    %v559 = vld [vmem:[#allocation2 + $0x294] sm:$0xff]
    %v560 = vld [vmem:[#allocation2 + $0x29c] sm:$0xf]
    %v561 = vld [vmem:[#allocation2 + $0x2a0] sm:$0xff]
    %v562 = vld [vmem:[#allocation2 + $0x2a8] sm:$0xf]
    %v563 = vld [vmem:[#allocation2 + $0x2ac] sm:$0xff]
    %v564 = vld [vmem:[#allocation2 + $0x2b4] sm:$0xf]
    %v565 = vld [vmem:[#allocation2 + $0x2b8] sm:$0xff]
    %v566 = vld [vmem:[#allocation2 + $0x2c0] sm:$0xf]
    %v567 = vld [vmem:[#allocation2 + $0x2c4] sm:$0xff]
    %v568 = vld [vmem:[#allocation2 + $0x2cc] sm:$0xf]
    %v569 = vld [vmem:[#allocation2 + $0x2d0] sm:$0xff]
    %v570 = vld [vmem:[#allocation2 + $0x2d8] sm:$0xf]
    %v571 = vld [vmem:[#allocation2 + $0x2dc] sm:$0xff]
    %v572 = vld [vmem:[#allocation2 + $0x2e4] sm:$0xf]
    %v573 = vld [vmem:[#allocation2 + $0x2e8] sm:$0xff]
    %v574 = vld [vmem:[#allocation2 + $0x2f0] sm:$0xf]
    %v575 = vld [vmem:[#allocation2 + $0x2f4] sm:$0xff]
    %v576 = vld [vmem:[#allocation2 + $0x2fc] sm:$0xf]
    %v577 = vld [vmem:[%s6] sm:$0x7]
    %v579 = vperm.slane %v577, 0
    %v580 = vperm.slane %v577, 1
    %v581 = vperm.slane %v577, 2
    %v713 = vunpack.c.l.b16 %v449
    %v714 = vunpack.c.h.b16 %v449
    %v715 = vunpack.c.l.b16 %v450
    %v716 = vunpack.c.l.b16 %v451
    %v717 = vunpack.c.h.b16 %v451
    %v718 = vunpack.c.l.b16 %v452
    %v719 = vunpack.c.l.b16 %v453
    %v720 = vunpack.c.h.b16 %v453
    %v721 = vunpack.c.l.b16 %v454
    %v722 = vunpack.c.l.b16 %v455
    %v723 = vunpack.c.h.b16 %v455
    %v724 = vunpack.c.l.b16 %v456
    %v725 = vunpack.c.l.b16 %v457
    %v726 = vunpack.c.h.b16 %v457
    %v727 = vunpack.c.l.b16 %v458
    %v728 = vunpack.c.l.b16 %v459
    %v729 = vunpack.c.h.b16 %v459
    %v730 = vunpack.c.l.b16 %v460
    %v731 = vunpack.c.l.b16 %v461
    %v732 = vunpack.c.h.b16 %v461
    %v733 = vunpack.c.l.b16 %v462
    %v734 = vunpack.c.l.b16 %v463
    %v735 = vunpack.c.h.b16 %v463
    %v736 = vunpack.c.l.b16 %v464
    %v737 = vunpack.c.l.b16 %v465
    %v738 = vunpack.c.h.b16 %v465
    %v739 = vunpack.c.l.b16 %v466
    %v740 = vunpack.c.l.b16 %v467
    %v741 = vunpack.c.h.b16 %v467
    %v742 = vunpack.c.l.b16 %v468
    %v743 = vunpack.c.l.b16 %v469
    %v744 = vunpack.c.h.b16 %v469
    %v745 = vunpack.c.l.b16 %v470
    %v746 = vunpack.c.l.b16 %v471
    %v747 = vunpack.c.h.b16 %v471
    %v748 = vunpack.c.l.b16 %v472
    %v749 = vunpack.c.l.b16 %v473
    %v750 = vunpack.c.h.b16 %v473
    %v751 = vunpack.c.l.b16 %v474
    %v752 = vunpack.c.l.b16 %v475
    %v753 = vunpack.c.h.b16 %v475
    %v754 = vunpack.c.l.b16 %v476
    %v755 = vunpack.c.l.b16 %v477
    %v756 = vunpack.c.h.b16 %v477
    %v757 = vunpack.c.l.b16 %v478
    %v758 = vunpack.c.l.b16 %v479
    %v759 = vunpack.c.h.b16 %v479
    %v760 = vunpack.c.l.b16 %v480
    %v761 = vunpack.c.l.b16 %v481
    %v762 = vunpack.c.h.b16 %v481
    %v763 = vunpack.c.l.b16 %v482
    %v764 = vunpack.c.l.b16 %v483
    %v765 = vunpack.c.h.b16 %v483
    %v766 = vunpack.c.l.b16 %v484
    %v767 = vunpack.c.l.b16 %v485
    %v768 = vunpack.c.h.b16 %v485
    %v769 = vunpack.c.l.b16 %v486
    %v770 = vunpack.c.l.b16 %v487
    %v771 = vunpack.c.h.b16 %v487
    %v772 = vunpack.c.l.b16 %v488
    %v773 = vunpack.c.l.b16 %v489
    %v774 = vunpack.c.h.b16 %v489
    %v775 = vunpack.c.l.b16 %v490
    %v776 = vunpack.c.l.b16 %v491
    %v777 = vunpack.c.h.b16 %v491
    %v778 = vunpack.c.l.b16 %v492
    %v779 = vunpack.c.l.b16 %v493
    %v780 = vunpack.c.h.b16 %v493
    %v781 = vunpack.c.l.b16 %v494
    %v782 = vunpack.c.l.b16 %v495
    %v783 = vunpack.c.h.b16 %v495
    %v784 = vunpack.c.l.b16 %v496
    %v785 = vunpack.c.l.b16 %v497
    %v786 = vunpack.c.h.b16 %v497
    %v787 = vunpack.c.l.b16 %v498
    %v788 = vunpack.c.l.b16 %v499
    %v789 = vunpack.c.h.b16 %v499
    %v790 = vunpack.c.l.b16 %v500
    %v791 = vunpack.c.l.b16 %v501
    %v792 = vunpack.c.h.b16 %v501
    %v793 = vunpack.c.l.b16 %v502
    %v794 = vunpack.c.l.b16 %v503
    %v795 = vunpack.c.h.b16 %v503
    %v796 = vunpack.c.l.b16 %v504
    %v797 = vunpack.c.l.b16 %v505
    %v798 = vunpack.c.h.b16 %v505
    %v799 = vunpack.c.l.b16 %v506
    %v800 = vunpack.c.l.b16 %v507
    %v801 = vunpack.c.h.b16 %v507
    %v802 = vunpack.c.l.b16 %v508
    %v803 = vunpack.c.l.b16 %v509
    %v804 = vunpack.c.h.b16 %v509
    %v805 = vunpack.c.l.b16 %v510
    %v806 = vunpack.c.l.b16 %v511
    %v807 = vunpack.c.h.b16 %v511
    %v808 = vunpack.c.l.b16 %v512
    %v809 = vunpack.c.l.b16 %v513
    %v810 = vunpack.c.h.b16 %v513
    %v811 = vunpack.c.l.b16 %v514
    %v812 = vunpack.c.l.b16 %v515
    %v813 = vunpack.c.h.b16 %v515
    %v814 = vunpack.c.l.b16 %v516
    %v815 = vunpack.c.l.b16 %v517
    %v816 = vunpack.c.h.b16 %v517
    %v817 = vunpack.c.l.b16 %v518
    %v818 = vunpack.c.l.b16 %v519
    %v819 = vunpack.c.h.b16 %v519
    %v820 = vunpack.c.l.b16 %v520
    %v821 = vunpack.c.l.b16 %v521
    %v822 = vunpack.c.h.b16 %v521
    %v823 = vunpack.c.l.b16 %v522
    %v824 = vunpack.c.l.b16 %v523
    %v825 = vunpack.c.h.b16 %v523
    %v826 = vunpack.c.l.b16 %v524
    %v827 = vunpack.c.l.b16 %v525
    %v828 = vunpack.c.h.b16 %v525
    %v829 = vunpack.c.l.b16 %v526
    %v830 = vunpack.c.l.b16 %v527
    %v831 = vunpack.c.h.b16 %v527
    %v832 = vunpack.c.l.b16 %v528
    %v833 = vunpack.c.l.b16 %v529
    %v834 = vunpack.c.h.b16 %v529
    %v835 = vunpack.c.l.b16 %v530
    %v836 = vunpack.c.l.b16 %v531
    %v837 = vunpack.c.h.b16 %v531
    %v838 = vunpack.c.l.b16 %v532
    %v839 = vunpack.c.l.b16 %v533
    %v840 = vunpack.c.h.b16 %v533
    %v841 = vunpack.c.l.b16 %v534
    %v842 = vunpack.c.l.b16 %v535
    %v843 = vunpack.c.h.b16 %v535
    %v844 = vunpack.c.l.b16 %v536
    %v845 = vunpack.c.l.b16 %v537
    %v846 = vunpack.c.h.b16 %v537
    %v847 = vunpack.c.l.b16 %v538
    %v848 = vunpack.c.l.b16 %v539
    %v849 = vunpack.c.h.b16 %v539
    %v850 = vunpack.c.l.b16 %v540
    %v851 = vunpack.c.l.b16 %v541
    %v852 = vunpack.c.h.b16 %v541
    %v853 = vunpack.c.l.b16 %v542
    %v854 = vunpack.c.l.b16 %v543
    %v855 = vunpack.c.h.b16 %v543
    %v856 = vunpack.c.l.b16 %v544
    %v857 = vunpack.c.l.b16 %v545
    %v858 = vunpack.c.h.b16 %v545
    %v859 = vunpack.c.l.b16 %v546
    %v860 = vunpack.c.l.b16 %v547
    %v861 = vunpack.c.h.b16 %v547
    %v862 = vunpack.c.l.b16 %v548
    %v863 = vunpack.c.l.b16 %v549
    %v864 = vunpack.c.h.b16 %v549
    %v865 = vunpack.c.l.b16 %v550
    %v866 = vunpack.c.l.b16 %v551
    %v867 = vunpack.c.h.b16 %v551
    %v868 = vunpack.c.l.b16 %v552
    %v869 = vunpack.c.l.b16 %v553
    %v870 = vunpack.c.h.b16 %v553
    %v871 = vunpack.c.l.b16 %v554
    %v872 = vunpack.c.l.b16 %v555
    %v873 = vunpack.c.h.b16 %v555
    %v874 = vunpack.c.l.b16 %v556
    %v875 = vunpack.c.l.b16 %v557
    %v876 = vunpack.c.h.b16 %v557
    %v877 = vunpack.c.l.b16 %v558
    %v878 = vunpack.c.l.b16 %v559
    %v879 = vunpack.c.h.b16 %v559
    %v880 = vunpack.c.l.b16 %v560
    %v881 = vunpack.c.l.b16 %v561
    %v882 = vunpack.c.h.b16 %v561
    %v883 = vunpack.c.l.b16 %v562
    %v884 = vunpack.c.l.b16 %v563
    %v885 = vunpack.c.h.b16 %v563
    %v886 = vunpack.c.l.b16 %v564
    %v887 = vunpack.c.l.b16 %v565
    %v888 = vunpack.c.h.b16 %v565
    %v889 = vunpack.c.l.b16 %v566
    %v890 = vunpack.c.l.b16 %v567
    %v891 = vunpack.c.h.b16 %v567
    %v892 = vunpack.c.l.b16 %v568
    %v893 = vunpack.c.l.b16 %v569
    %v894 = vunpack.c.h.b16 %v569
    %v895 = vunpack.c.l.b16 %v570
    %v896 = vunpack.c.l.b16 %v571
    %v897 = vunpack.c.h.b16 %v571
    %v898 = vunpack.c.l.b16 %v572
    %v899 = vunpack.c.l.b16 %v573
    %v900 = vunpack.c.h.b16 %v573
    %v901 = vunpack.c.l.b16 %v574
    %v902 = vunpack.c.l.b16 %v575
    %v903 = vunpack.c.h.b16 %v575
    %v904 = vunpack.c.l.b16 %v576
    %v905 = vpack.c.b16 %v716, %v713
    %v906 = vpack.c.b16 %v717, %v714
    %v907 = vpack.c.b16 %v718, %v715
    %v908 = vpack.c.b16 %v722, %v719
    %v909 = vpack.c.b16 %v723, %v720
    %v910 = vpack.c.b16 %v724, %v721
    %v911 = vpack.c.b16 %v728, %v725
    %v912 = vpack.c.b16 %v729, %v726
    %v913 = vpack.c.b16 %v730, %v727
    %v914 = vpack.c.b16 %v734, %v731
    %v915 = vpack.c.b16 %v735, %v732
    %v916 = vpack.c.b16 %v736, %v733
    %v917 = vpack.c.b16 %v740, %v737
    %v918 = vpack.c.b16 %v741, %v738
    %v919 = vpack.c.b16 %v742, %v739
    %v920 = vpack.c.b16 %v746, %v743
    %v921 = vpack.c.b16 %v747, %v744
    %v922 = vpack.c.b16 %v748, %v745
    %v923 = vpack.c.b16 %v752, %v749
    %v924 = vpack.c.b16 %v753, %v750
    %v925 = vpack.c.b16 %v754, %v751
    %v926 = vpack.c.b16 %v758, %v755
    %v927 = vpack.c.b16 %v759, %v756
    %v928 = vpack.c.b16 %v760, %v757
    %v929 = vpack.c.b16 %v764, %v761
    %v930 = vpack.c.b16 %v765, %v762
    %v931 = vpack.c.b16 %v766, %v763
    %v932 = vpack.c.b16 %v770, %v767
    %v933 = vpack.c.b16 %v771, %v768
    %v934 = vpack.c.b16 %v772, %v769
    %v935 = vpack.c.b16 %v776, %v773
    %v936 = vpack.c.b16 %v777, %v774
    %v937 = vpack.c.b16 %v778, %v775
    %v938 = vpack.c.b16 %v782, %v779
    %v939 = vpack.c.b16 %v783, %v780
    %v940 = vpack.c.b16 %v784, %v781
    %v941 = vpack.c.b16 %v788, %v785
    %v942 = vpack.c.b16 %v789, %v786
    %v943 = vpack.c.b16 %v790, %v787
    %v944 = vpack.c.b16 %v794, %v791
    %v945 = vpack.c.b16 %v795, %v792
    %v946 = vpack.c.b16 %v796, %v793
    %v947 = vpack.c.b16 %v800, %v797
    %v948 = vpack.c.b16 %v801, %v798
    %v949 = vpack.c.b16 %v802, %v799
    %v950 = vpack.c.b16 %v806, %v803
    %v951 = vpack.c.b16 %v807, %v804
    %v952 = vpack.c.b16 %v808, %v805
    %v953 = vpack.c.b16 %v812, %v809
    %v954 = vpack.c.b16 %v813, %v810
    %v955 = vpack.c.b16 %v814, %v811
    %v956 = vpack.c.b16 %v818, %v815
    %v957 = vpack.c.b16 %v819, %v816
    %v958 = vpack.c.b16 %v820, %v817
    %v959 = vpack.c.b16 %v824, %v821
    %v960 = vpack.c.b16 %v825, %v822
    %v961 = vpack.c.b16 %v826, %v823
    %v962 = vpack.c.b16 %v830, %v827
    %v963 = vpack.c.b16 %v831, %v828
    %v964 = vpack.c.b16 %v832, %v829
    %v965 = vpack.c.b16 %v836, %v833
    %v966 = vpack.c.b16 %v837, %v834
    %v967 = vpack.c.b16 %v838, %v835
    %v968 = vpack.c.b16 %v842, %v839
    %v969 = vpack.c.b16 %v843, %v840
    %v970 = vpack.c.b16 %v844, %v841
    %v971 = vpack.c.b16 %v848, %v845
    %v972 = vpack.c.b16 %v849, %v846
    %v973 = vpack.c.b16 %v850, %v847
    %v974 = vpack.c.b16 %v854, %v851
    %v975 = vpack.c.b16 %v855, %v852
    %v976 = vpack.c.b16 %v856, %v853
    %v977 = vpack.c.b16 %v860, %v857
    %v978 = vpack.c.b16 %v861, %v858
    %v979 = vpack.c.b16 %v862, %v859
    %v980 = vpack.c.b16 %v866, %v863
    %v981 = vpack.c.b16 %v867, %v864
    %v982 = vpack.c.b16 %v868, %v865
    %v983 = vpack.c.b16 %v872, %v869
    %v984 = vpack.c.b16 %v873, %v870
    %v985 = vpack.c.b16 %v874, %v871
    %v986 = vpack.c.b16 %v878, %v875
    %v987 = vpack.c.b16 %v879, %v876
    %v988 = vpack.c.b16 %v880, %v877
    %v989 = vpack.c.b16 %v884, %v881
    %v990 = vpack.c.b16 %v885, %v882
    %v991 = vpack.c.b16 %v886, %v883
    %v992 = vpack.c.b16 %v890, %v887
    %v993 = vpack.c.b16 %v891, %v888
    %v994 = vpack.c.b16 %v892, %v889
    %v995 = vpack.c.b16 %v896, %v893
    %v996 = vpack.c.b16 %v897, %v894
    %v997 = vpack.c.b16 %v898, %v895
    %v998 = vpack.c.b16 %v902, %v899
    %v999 = vpack.c.b16 %v903, %v900
    %v1000 = vpack.c.b16 %v904, %v901
    %1097 = vmatpush.bf16.msra.mxu0 %v926
    %1098 = vmatpush.bf16.msra.mxu0 %v923
    %1099 = vmatpush.bf16.msra.mxu0 %v920
    %1100 = vmatpush.bf16.msra.mxu0 %v917
    %1101 = vmatpush.bf16.msra.mxu0 %v914
    %1102 = vmatpush.bf16.msra.mxu0 %v911
    %1103 = vmatpush.bf16.msra.mxu0 %v908
    %1104 = vmatpush.bf16.msra.mxu0 %v905
    %1105 = vmatmul.bf16.gmra.mxu0 %v433
    %v1106 = vpop.f32.mrf.mxu0
    %v1107 = vadd.f32 %v579, %v1106
    %v1108 = vpop.f32.mrf.mxu0
    %v1109 = vadd.f32 %v579, %v1108
    %1110 = vmatmul.bf16.gmra.mxu0 %v437
    %v1111 = vpop.f32.mrf.mxu0
    %v1112 = vadd.f32 %v579, %v1111
    %v1113 = vpop.f32.mrf.mxu0
    %v1114 = vadd.f32 %v579, %v1113
    %1115 = vmatmul.bf16.gmra.mxu0 %v441
    %v1116 = vpop.f32.mrf.mxu0
    %v1117 = vadd.f32 %v579, %v1116
    %v1118 = vpop.f32.mrf.mxu0
    %v1119 = vadd.f32 %v579, %v1118
    %1120 = vmatmul.bf16.gmra.mxu0 %v445
    %v1121 = vpop.f32.mrf.mxu0
    %v1122 = vadd.f32 %v579, %v1121
    %v1123 = vpop.f32.mrf.mxu0
    %v1124 = vadd.f32 %v579, %v1123
    %1125 = vdwg.mxu0
    %1126 = vmatpush.bf16.msra.mxu0 %v950
    %1127 = vmatpush.bf16.msra.mxu0 %v947
    %1128 = vmatpush.bf16.msra.mxu0 %v944
    %1129 = vmatpush.bf16.msra.mxu0 %v941
    %1130 = vmatpush.bf16.msra.mxu0 %v938
    %1131 = vmatpush.bf16.msra.mxu0 %v935
    %1132 = vmatpush.bf16.msra.mxu0 %v932
    %1133 = vmatpush.bf16.msra.mxu0 %v929
    %1134 = vmatmul.bf16.gmra.mxu0 %v434
    %v1135 = vpop.f32.mrf.mxu0
    %v1136 = vadd.f32 %v1107, %v1135
    %v1137 = vpop.f32.mrf.mxu0
    %v1138 = vadd.f32 %v1109, %v1137
    %1139 = vmatmul.bf16.gmra.mxu0 %v438
    %v1140 = vpop.f32.mrf.mxu0
    %v1141 = vadd.f32 %v1112, %v1140
    %v1142 = vpop.f32.mrf.mxu0
    %v1143 = vadd.f32 %v1114, %v1142
    %1144 = vmatmul.bf16.gmra.mxu0 %v442
    %v1145 = vpop.f32.mrf.mxu0
    %v1146 = vadd.f32 %v1117, %v1145
    %v1147 = vpop.f32.mrf.mxu0
    %v1148 = vadd.f32 %v1119, %v1147
    %1149 = vmatmul.bf16.gmra.mxu0 %v446
    %v1150 = vpop.f32.mrf.mxu0
    %v1151 = vadd.f32 %v1122, %v1150
    %v1152 = vpop.f32.mrf.mxu0
    %v1153 = vadd.f32 %v1124, %v1152
    %1154 = vdwg.mxu0
    %1155 = vmatpush.bf16.msra.mxu0 %v974
    %1156 = vmatpush.bf16.msra.mxu0 %v971
    %1157 = vmatpush.bf16.msra.mxu0 %v968
    %1158 = vmatpush.bf16.msra.mxu0 %v965
    %1159 = vmatpush.bf16.msra.mxu0 %v962
    %1160 = vmatpush.bf16.msra.mxu0 %v959
    %1161 = vmatpush.bf16.msra.mxu0 %v956
    %1162 = vmatpush.bf16.msra.mxu0 %v953
    %1163 = vmatmul.bf16.gmra.mxu0 %v435
    %v1164 = vpop.f32.mrf.mxu0
    %v1165 = vadd.f32 %v1136, %v1164
    %v1166 = vpop.f32.mrf.mxu0
    %v1167 = vadd.f32 %v1138, %v1166
    %1168 = vmatmul.bf16.gmra.mxu0 %v439
    %v1169 = vpop.f32.mrf.mxu0
    %v1170 = vadd.f32 %v1141, %v1169
    %v1171 = vpop.f32.mrf.mxu0
    %v1172 = vadd.f32 %v1143, %v1171
    %1173 = vmatmul.bf16.gmra.mxu0 %v443
    %v1174 = vpop.f32.mrf.mxu0
    %v1175 = vadd.f32 %v1146, %v1174
    %v1176 = vpop.f32.mrf.mxu0
    %v1177 = vadd.f32 %v1148, %v1176
    %1178 = vmatmul.bf16.gmra.mxu0 %v447
    %v1179 = vpop.f32.mrf.mxu0
    %v1180 = vadd.f32 %v1151, %v1179
    %v1181 = vpop.f32.mrf.mxu0
    %v1182 = vadd.f32 %v1153, %v1181
    %1183 = vdwg.mxu0
    %1184 = vmatpush.bf16.msra.mxu0 %v998
    %1185 = vmatpush.bf16.msra.mxu0 %v995
    %1186 = vmatpush.bf16.msra.mxu0 %v992
    %1187 = vmatpush.bf16.msra.mxu0 %v989
    %1188 = vmatpush.bf16.msra.mxu0 %v986
    %1189 = vmatpush.bf16.msra.mxu0 %v983
    %1190 = vmatpush.bf16.msra.mxu0 %v980
    %1191 = vmatpush.bf16.msra.mxu0 %v977
    %1192 = vmatmul.bf16.gmra.mxu0 %v436
    %v1193 = vpop.f32.mrf.mxu0
    %v1194 = vadd.f32 %v1165, %v1193
    %v1195 = vpop.f32.mrf.mxu0
    %v1196 = vadd.f32 %v1167, %v1195
    %1197 = vmatmul.bf16.gmra.mxu0 %v440
    %v1198 = vpop.f32.mrf.mxu0
    %v1199 = vadd.f32 %v1170, %v1198
    %v1200 = vpop.f32.mrf.mxu0
    %v1201 = vadd.f32 %v1172, %v1200
    %1202 = vmatmul.bf16.gmra.mxu0 %v444
    %v1203 = vpop.f32.mrf.mxu0
    %v1204 = vadd.f32 %v1175, %v1203
    %v1205 = vpop.f32.mrf.mxu0
    %v1206 = vadd.f32 %v1177, %v1205
    %1207 = vmatmul.bf16.gmra.mxu0 %v448
    %v1208 = vpop.f32.mrf.mxu0
    %v1209 = vadd.f32 %v1180, %v1208
    %v1210 = vpop.f32.mrf.mxu0
    %v1211 = vadd.f32 %v1182, %v1210
    %1212 = vdwg.mxu0
    %1213 = vmatpush.bf16.msra.mxu0 %v927
    %1214 = vmatpush.bf16.msra.mxu0 %v924
    %1215 = vmatpush.bf16.msra.mxu0 %v921
    %1216 = vmatpush.bf16.msra.mxu0 %v918
    %1217 = vmatpush.bf16.msra.mxu0 %v915
    %1218 = vmatpush.bf16.msra.mxu0 %v912
    %1219 = vmatpush.bf16.msra.mxu0 %v909
    %1220 = vmatpush.bf16.msra.mxu0 %v906
    %1221 = vmatmul.bf16.gmra.mxu0 %v433
    %v1222 = vpop.f32.mrf.mxu0
    %v1223 = vadd.f32 %v580, %v1222
    %v1224 = vpop.f32.mrf.mxu0
    %v1225 = vadd.f32 %v580, %v1224
    %1226 = vmatmul.bf16.gmra.mxu0 %v437
    %v1227 = vpop.f32.mrf.mxu0
    %v1228 = vadd.f32 %v580, %v1227
    %v1229 = vpop.f32.mrf.mxu0
    %v1230 = vadd.f32 %v580, %v1229
    %1231 = vmatmul.bf16.gmra.mxu0 %v441
    %v1232 = vpop.f32.mrf.mxu0
    %v1233 = vadd.f32 %v580, %v1232
    %v1234 = vpop.f32.mrf.mxu0
    %v1235 = vadd.f32 %v580, %v1234
    %1236 = vmatmul.bf16.gmra.mxu0 %v445
    %v1237 = vpop.f32.mrf.mxu0
    %v1238 = vadd.f32 %v580, %v1237
    %v1239 = vpop.f32.mrf.mxu0
    %v1240 = vadd.f32 %v580, %v1239
    %1241 = vdwg.mxu0
    %1242 = vmatpush.bf16.msra.mxu0 %v951
    %1243 = vmatpush.bf16.msra.mxu0 %v948
    %1244 = vmatpush.bf16.msra.mxu0 %v945
    %1245 = vmatpush.bf16.msra.mxu0 %v942
    %1246 = vmatpush.bf16.msra.mxu0 %v939
    %1247 = vmatpush.bf16.msra.mxu0 %v936
    %1248 = vmatpush.bf16.msra.mxu0 %v933
    %1249 = vmatpush.bf16.msra.mxu0 %v930
    %1250 = vmatmul.bf16.gmra.mxu0 %v434
    %v1251 = vpop.f32.mrf.mxu0
    %v1252 = vadd.f32 %v1223, %v1251
    %v1253 = vpop.f32.mrf.mxu0
    %v1254 = vadd.f32 %v1225, %v1253
    %1255 = vmatmul.bf16.gmra.mxu0 %v438
    %v1256 = vpop.f32.mrf.mxu0
    %v1257 = vadd.f32 %v1228, %v1256
    %v1258 = vpop.f32.mrf.mxu0
    %v1259 = vadd.f32 %v1230, %v1258
    %1260 = vmatmul.bf16.gmra.mxu0 %v442
    %v1261 = vpop.f32.mrf.mxu0
    %v1262 = vadd.f32 %v1233, %v1261
    %v1263 = vpop.f32.mrf.mxu0
    %v1264 = vadd.f32 %v1235, %v1263
    %1265 = vmatmul.bf16.gmra.mxu0 %v446
    %v1266 = vpop.f32.mrf.mxu0
    %v1267 = vadd.f32 %v1238, %v1266
    %v1268 = vpop.f32.mrf.mxu0
    %v1269 = vadd.f32 %v1240, %v1268
    %1270 = vdwg.mxu0
    %1271 = vmatpush.bf16.msra.mxu0 %v975
    %1272 = vmatpush.bf16.msra.mxu0 %v972
    %1273 = vmatpush.bf16.msra.mxu0 %v969
    %1274 = vmatpush.bf16.msra.mxu0 %v966
    %1275 = vmatpush.bf16.msra.mxu0 %v963
    %1276 = vmatpush.bf16.msra.mxu0 %v960
    %1277 = vmatpush.bf16.msra.mxu0 %v957
    %1278 = vmatpush.bf16.msra.mxu0 %v954
    %1279 = vmatmul.bf16.gmra.mxu0 %v435
    %v1280 = vpop.f32.mrf.mxu0
    %v1281 = vadd.f32 %v1252, %v1280
    %v1282 = vpop.f32.mrf.mxu0
    %v1283 = vadd.f32 %v1254, %v1282
    %1284 = vmatmul.bf16.gmra.mxu0 %v439
    %v1285 = vpop.f32.mrf.mxu0
    %v1286 = vadd.f32 %v1257, %v1285
    %v1287 = vpop.f32.mrf.mxu0
    %v1288 = vadd.f32 %v1259, %v1287
    %1289 = vmatmul.bf16.gmra.mxu0 %v443
    %v1290 = vpop.f32.mrf.mxu0
    %v1291 = vadd.f32 %v1262, %v1290
    %v1292 = vpop.f32.mrf.mxu0
    %v1293 = vadd.f32 %v1264, %v1292
    %1294 = vmatmul.bf16.gmra.mxu0 %v447
    %v1295 = vpop.f32.mrf.mxu0
    %v1296 = vadd.f32 %v1267, %v1295
    %v1297 = vpop.f32.mrf.mxu0
    %v1298 = vadd.f32 %v1269, %v1297
    %1299 = vdwg.mxu0
    %1300 = vmatpush.bf16.msra.mxu0 %v999
    %1301 = vmatpush.bf16.msra.mxu0 %v996
    %1302 = vmatpush.bf16.msra.mxu0 %v993
    %1303 = vmatpush.bf16.msra.mxu0 %v990
    %1304 = vmatpush.bf16.msra.mxu0 %v987
    %1305 = vmatpush.bf16.msra.mxu0 %v984
    %1306 = vmatpush.bf16.msra.mxu0 %v981
    %1307 = vmatpush.bf16.msra.mxu0 %v978
    %1308 = vmatmul.bf16.gmra.mxu0 %v436
    %v1309 = vpop.f32.mrf.mxu0
    %v1310 = vadd.f32 %v1281, %v1309
    %v1311 = vpop.f32.mrf.mxu0
    %v1312 = vadd.f32 %v1283, %v1311
    %1313 = vmatmul.bf16.gmra.mxu0 %v440
    %v1314 = vpop.f32.mrf.mxu0
    %v1315 = vadd.f32 %v1286, %v1314
    %v1316 = vpop.f32.mrf.mxu0
    %v1317 = vadd.f32 %v1288, %v1316
    %1318 = vmatmul.bf16.gmra.mxu0 %v444
    %v1319 = vpop.f32.mrf.mxu0
    %v1320 = vadd.f32 %v1291, %v1319
    %v1321 = vpop.f32.mrf.mxu0
    %v1322 = vadd.f32 %v1293, %v1321
    %1323 = vmatmul.bf16.gmra.mxu0 %v448
    %v1324 = vpop.f32.mrf.mxu0
    %v1325 = vadd.f32 %v1296, %v1324
    %v1326 = vpop.f32.mrf.mxu0
    %v1327 = vadd.f32 %v1298, %v1326
    %1328 = vdwg.mxu0
    %1329 = vmatpush.bf16.msra.mxu0 %v928
    %1330 = vmatpush.bf16.msra.mxu0 %v925
    %1331 = vmatpush.bf16.msra.mxu0 %v922
    %1332 = vmatpush.bf16.msra.mxu0 %v919
    %1333 = vmatpush.bf16.msra.mxu0 %v916
    %1334 = vmatpush.bf16.msra.mxu0 %v913
    %1335 = vmatpush.bf16.msra.mxu0 %v910
    %1336 = vmatpush.bf16.msra.mxu0 %v907
    %1337 = vmatmul.bf16.gmra.mxu0 %v433
    %v1338 = vpop.f32.mrf.mxu0
    %v1339 = vadd.f32 %v581, %v1338
    %v1340 = vpop.f32.mrf.mxu0
    %v1341 = vadd.f32 %v581, %v1340
    %1342 = vmatmul.bf16.gmra.mxu0 %v437
    %v1343 = vpop.f32.mrf.mxu0
    %v1344 = vadd.f32 %v581, %v1343
    %v1345 = vpop.f32.mrf.mxu0
    %v1346 = vadd.f32 %v581, %v1345
    %1347 = vmatmul.bf16.gmra.mxu0 %v441
    %v1348 = vpop.f32.mrf.mxu0
    %v1349 = vadd.f32 %v581, %v1348
    %v1350 = vpop.f32.mrf.mxu0
    %v1351 = vadd.f32 %v581, %v1350
    %1352 = vmatmul.bf16.gmra.mxu0 %v445
    %v1353 = vpop.f32.mrf.mxu0
    %v1354 = vadd.f32 %v581, %v1353
    %v1355 = vpop.f32.mrf.mxu0
    %v1356 = vadd.f32 %v581, %v1355
    %1357 = vdwg.mxu0
    %1358 = vmatpush.bf16.msra.mxu0 %v952
    %1359 = vmatpush.bf16.msra.mxu0 %v949
    %1360 = vmatpush.bf16.msra.mxu0 %v946
    %1361 = vmatpush.bf16.msra.mxu0 %v943
    %1362 = vmatpush.bf16.msra.mxu0 %v940
    %1363 = vmatpush.bf16.msra.mxu0 %v937
    %1364 = vmatpush.bf16.msra.mxu0 %v934
    %1365 = vmatpush.bf16.msra.mxu0 %v931
    %1366 = vmatmul.bf16.gmra.mxu0 %v434
    %v1367 = vpop.f32.mrf.mxu0
    %v1368 = vadd.f32 %v1339, %v1367
    %v1369 = vpop.f32.mrf.mxu0
    %v1370 = vadd.f32 %v1341, %v1369
    %1371 = vmatmul.bf16.gmra.mxu0 %v438
    %v1372 = vpop.f32.mrf.mxu0
    %v1373 = vadd.f32 %v1344, %v1372
    %v1374 = vpop.f32.mrf.mxu0
    %v1375 = vadd.f32 %v1346, %v1374
    %1376 = vmatmul.bf16.gmra.mxu0 %v442
    %v1377 = vpop.f32.mrf.mxu0
    %v1378 = vadd.f32 %v1349, %v1377
    %v1379 = vpop.f32.mrf.mxu0
    %v1380 = vadd.f32 %v1351, %v1379
    %1381 = vmatmul.bf16.gmra.mxu0 %v446
    %v1382 = vpop.f32.mrf.mxu0
    %v1383 = vadd.f32 %v1354, %v1382
    %v1384 = vpop.f32.mrf.mxu0
    %v1385 = vadd.f32 %v1356, %v1384
    %1386 = vdwg.mxu0
    %1387 = vmatpush.bf16.msra.mxu0 %v976
    %1388 = vmatpush.bf16.msra.mxu0 %v973
    %1389 = vmatpush.bf16.msra.mxu0 %v970
    %1390 = vmatpush.bf16.msra.mxu0 %v967
    %1391 = vmatpush.bf16.msra.mxu0 %v964
    %1392 = vmatpush.bf16.msra.mxu0 %v961
    %1393 = vmatpush.bf16.msra.mxu0 %v958
    %1394 = vmatpush.bf16.msra.mxu0 %v955
    %1395 = vmatmul.bf16.gmra.mxu0 %v435
    %v1396 = vpop.f32.mrf.mxu0
    %v1397 = vadd.f32 %v1368, %v1396
    %v1398 = vpop.f32.mrf.mxu0
    %v1399 = vadd.f32 %v1370, %v1398
    %1400 = vmatmul.bf16.gmra.mxu0 %v439
    %v1401 = vpop.f32.mrf.mxu0
    %v1402 = vadd.f32 %v1373, %v1401
    %v1403 = vpop.f32.mrf.mxu0
    %v1404 = vadd.f32 %v1375, %v1403
    %1405 = vmatmul.bf16.gmra.mxu0 %v443
    %v1406 = vpop.f32.mrf.mxu0
    %v1407 = vadd.f32 %v1378, %v1406
    %v1408 = vpop.f32.mrf.mxu0
    %v1409 = vadd.f32 %v1380, %v1408
    %1410 = vmatmul.bf16.gmra.mxu0 %v447
    %v1411 = vpop.f32.mrf.mxu0
    %v1412 = vadd.f32 %v1383, %v1411
    %v1413 = vpop.f32.mrf.mxu0
    %v1414 = vadd.f32 %v1385, %v1413
    %1415 = vdwg.mxu0
    %1416 = vmatpush.bf16.msra.mxu0 %v1000
    %1417 = vmatpush.bf16.msra.mxu0 %v997
    %1418 = vmatpush.bf16.msra.mxu0 %v994
    %1419 = vmatpush.bf16.msra.mxu0 %v991
    %1420 = vmatpush.bf16.msra.mxu0 %v988
    %1421 = vmatpush.bf16.msra.mxu0 %v985
    %1422 = vmatpush.bf16.msra.mxu0 %v982
    %1423 = vmatpush.bf16.msra.mxu0 %v979
    %1424 = vmatmul.bf16.gmra.mxu0 %v436
    %v1425 = vpop.f32.mrf.mxu0
    %v1426 = vadd.f32 %v1397, %v1425
    %v1427 = vpop.f32.mrf.mxu0
    %v1428 = vadd.f32 %v1399, %v1427
    %1429 = vmatmul.bf16.gmra.mxu0 %v440
    %v1430 = vpop.f32.mrf.mxu0
    %v1431 = vadd.f32 %v1402, %v1430
    %v1432 = vpop.f32.mrf.mxu0
    %v1433 = vadd.f32 %v1404, %v1432
    %1434 = vmatmul.bf16.gmra.mxu0 %v444
    %v1435 = vpop.f32.mrf.mxu0
    %v1436 = vadd.f32 %v1407, %v1435
    %v1437 = vpop.f32.mrf.mxu0
    %v1438 = vadd.f32 %v1409, %v1437
    %1439 = vmatmul.bf16.gmra.mxu0 %v448
    %v1440 = vpop.f32.mrf.mxu0
    %v1441 = vadd.f32 %v1412, %v1440
    %v1442 = vpop.f32.mrf.mxu0
    %v1443 = vadd.f32 %v1414, %v1442
    %1444 = vdwg.mxu0
    %v1445 = vmax.f32 %v1194, 0.0
    %v1446 = vmax.f32 %v1310, 0.0
    %v1447 = vmax.f32 %v1426, 0.0
    %v1448 = vmax.f32 %v1196, 0.0
    %v1449 = vmax.f32 %v1312, 0.0
    %v1450 = vmax.f32 %v1428, 0.0
    %v1451 = vmax.f32 %v1199, 0.0
    %v1452 = vmax.f32 %v1315, 0.0
    %v1453 = vmax.f32 %v1431, 0.0
    %v1454 = vmax.f32 %v1201, 0.0
    %v1455 = vmax.f32 %v1317, 0.0
    %v1456 = vmax.f32 %v1433, 0.0
    %v1457 = vmax.f32 %v1204, 0.0
    %v1458 = vmax.f32 %v1320, 0.0
    %v1459 = vmax.f32 %v1436, 0.0
    %v1460 = vmax.f32 %v1206, 0.0
    %v1461 = vmax.f32 %v1322, 0.0
    %v1462 = vmax.f32 %v1438, 0.0
    %v1463 = vmax.f32 %v1209, 0.0
    %v1464 = vmax.f32 %v1325, 0.0
    %v1465 = vmax.f32 %v1441, 0.0
    %v1466 = vmax.f32 %v1211, 0.0
    %v1467 = vmax.f32 %v1327, 0.0
    %v1468 = vmax.f32 %v1443, 0.0
    %v1469 = vpack.c.bf16 %v1448, %v1445
    %v1470 = vpack.c.bf16 %v1449, %v1446
    %v1471 = vpack.c.bf16 %v1450, %v1447
    %v1472 = vpack.c.bf16 %v1454, %v1451
    %v1473 = vpack.c.bf16 %v1455, %v1452
    %v1474 = vpack.c.bf16 %v1456, %v1453
    %v1475 = vpack.c.bf16 %v1460, %v1457
    %v1476 = vpack.c.bf16 %v1461, %v1458
    %v1477 = vpack.c.bf16 %v1462, %v1459
    %v1478 = vpack.c.bf16 %v1466, %v1463
    %v1479 = vpack.c.bf16 %v1467, %v1464
    %v1480 = vpack.c.bf16 %v1468, %v1465
    %v1481 = vld [vmem:[#allocation4] sm:$0xf]
    %v1482 = vld [vmem:[#allocation4 + $0x4] sm:$0xf]
    %v1483 = vld [vmem:[#allocation4 + $0x8] sm:$0xf]
    %v1484 = vld [vmem:[#allocation4 + $0xc] sm:$0xf]
    %v1485 = vld [vmem:[#allocation4 + $0x10] sm:$0xf]
    %v1486 = vld [vmem:[#allocation4 + $0x14] sm:$0xf]
    %v1487 = vld [vmem:[#allocation4 + $0x18] sm:$0xf]
    %v1488 = vld [vmem:[#allocation4 + $0x1c] sm:$0xf]
    %v1489 = vld [vmem:[#allocation4 + $0x20] sm:$0xf]
    %v1490 = vld [vmem:[#allocation4 + $0x24] sm:$0xf]
    %v1491 = vld [vmem:[#allocation4 + $0x28] sm:$0xf]
    %v1492 = vld [vmem:[#allocation4 + $0x2c] sm:$0xf]
    %v1493 = vld [vmem:[#allocation4 + $0x30] sm:$0xf]
    %v1494 = vld [vmem:[#allocation4 + $0x34] sm:$0xf]
    %v1495 = vld [vmem:[#allocation4 + $0x38] sm:$0xf]
    %v1496 = vld [vmem:[#allocation4 + $0x3c] sm:$0xf]
    %v1497 = vld [vmem:[#allocation4 + $0x40] sm:$0xf]
    %v1498 = vld [vmem:[#allocation4 + $0x44] sm:$0xf]
    %v1499 = vld [vmem:[#allocation4 + $0x48] sm:$0xf]
    %v1500 = vld [vmem:[#allocation4 + $0x4c] sm:$0xf]
    %v1501 = vld [vmem:[#allocation4 + $0x50] sm:$0xf]
    %v1502 = vld [vmem:[#allocation4 + $0x54] sm:$0xf]
    %v1503 = vld [vmem:[#allocation4 + $0x58] sm:$0xf]
    %v1504 = vld [vmem:[#allocation4 + $0x5c] sm:$0xf]
    %v1505 = vld [vmem:[#allocation4 + $0x60] sm:$0xf]
    %v1506 = vld [vmem:[#allocation4 + $0x64] sm:$0xf]
    %v1507 = vld [vmem:[#allocation4 + $0x68] sm:$0xf]
    %v1508 = vld [vmem:[#allocation4 + $0x6c] sm:$0xf]
    %v1509 = vld [vmem:[#allocation4 + $0x70] sm:$0xf]
    %v1510 = vld [vmem:[#allocation4 + $0x74] sm:$0xf]
    %v1511 = vld [vmem:[#allocation4 + $0x78] sm:$0xf]
    %v1512 = vld [vmem:[#allocation4 + $0x7c] sm:$0xf]
    %v1513 = vld [vmem:[#allocation4 + $0x80] sm:$0xf]
    %v1514 = vld [vmem:[#allocation4 + $0x84] sm:$0xf]
    %v1515 = vld [vmem:[#allocation4 + $0x88] sm:$0xf]
    %v1516 = vld [vmem:[#allocation4 + $0x8c] sm:$0xf]
    %v1517 = vld [vmem:[#allocation4 + $0x90] sm:$0xf]
    %v1518 = vld [vmem:[#allocation4 + $0x94] sm:$0xf]
    %v1519 = vld [vmem:[#allocation4 + $0x98] sm:$0xf]
    %v1520 = vld [vmem:[#allocation4 + $0x9c] sm:$0xf]
    %v1521 = vld [vmem:[#allocation4 + $0xa0] sm:$0xf]
    %v1522 = vld [vmem:[#allocation4 + $0xa4] sm:$0xf]
    %v1523 = vld [vmem:[#allocation4 + $0xa8] sm:$0xf]
    %v1524 = vld [vmem:[#allocation4 + $0xac] sm:$0xf]
    %v1525 = vld [vmem:[#allocation4 + $0xb0] sm:$0xf]
    %v1526 = vld [vmem:[#allocation4 + $0xb4] sm:$0xf]
    %v1527 = vld [vmem:[#allocation4 + $0xb8] sm:$0xf]
    %v1528 = vld [vmem:[#allocation4 + $0xbc] sm:$0xf]
    %v1529 = vld [vmem:[%s8] sm:$0x1]
    %v1531 = vperm.slane %v1529, 0
    %v1581 = vunpack.c.l.b16 %v1481
    %v1582 = vunpack.c.l.b16 %v1482
    %v1583 = vunpack.c.l.b16 %v1483
    %v1584 = vunpack.c.l.b16 %v1484
    %v1585 = vunpack.c.l.b16 %v1485
    %v1586 = vunpack.c.l.b16 %v1486
    %v1587 = vunpack.c.l.b16 %v1487
    %v1588 = vunpack.c.l.b16 %v1488
    %v1589 = vunpack.c.l.b16 %v1489
    %v1590 = vunpack.c.l.b16 %v1490
    %v1591 = vunpack.c.l.b16 %v1491
    %v1592 = vunpack.c.l.b16 %v1492
    %v1593 = vunpack.c.l.b16 %v1493
    %v1594 = vunpack.c.l.b16 %v1494
    %v1595 = vunpack.c.l.b16 %v1495
    %v1596 = vunpack.c.l.b16 %v1496
    %v1597 = vunpack.c.l.b16 %v1497
    %v1598 = vunpack.c.l.b16 %v1498
    %v1599 = vunpack.c.l.b16 %v1499
    %v1600 = vunpack.c.l.b16 %v1500
    %v1601 = vunpack.c.l.b16 %v1501
    %v1602 = vunpack.c.l.b16 %v1502
    %v1603 = vunpack.c.l.b16 %v1503
    %v1604 = vunpack.c.l.b16 %v1504
    %v1605 = vunpack.c.l.b16 %v1505
    %v1606 = vunpack.c.l.b16 %v1506
    %v1607 = vunpack.c.l.b16 %v1507
    %v1608 = vunpack.c.l.b16 %v1508
    %v1609 = vunpack.c.l.b16 %v1509
    %v1610 = vunpack.c.l.b16 %v1510
    %v1611 = vunpack.c.l.b16 %v1511
    %v1612 = vunpack.c.l.b16 %v1512
    %v1613 = vunpack.c.l.b16 %v1513
    %v1614 = vunpack.c.l.b16 %v1514
    %v1615 = vunpack.c.l.b16 %v1515
    %v1616 = vunpack.c.l.b16 %v1516
    %v1617 = vunpack.c.l.b16 %v1517
    %v1618 = vunpack.c.l.b16 %v1518
    %v1619 = vunpack.c.l.b16 %v1519
    %v1620 = vunpack.c.l.b16 %v1520
    %v1621 = vunpack.c.l.b16 %v1521
    %v1622 = vunpack.c.l.b16 %v1522
    %v1623 = vunpack.c.l.b16 %v1523
    %v1624 = vunpack.c.l.b16 %v1524
    %v1625 = vunpack.c.l.b16 %v1525
    %v1626 = vunpack.c.l.b16 %v1526
    %v1627 = vunpack.c.l.b16 %v1527
    %v1628 = vunpack.c.l.b16 %v1528
    %v1629 = vpack.c.b16 %v1582, %v1581
    %v1630 = vpack.c.b16 %v1584, %v1583
    %v1631 = vpack.c.b16 %v1586, %v1585
    %v1632 = vpack.c.b16 %v1588, %v1587
    %v1633 = vpack.c.b16 %v1590, %v1589
    %v1634 = vpack.c.b16 %v1592, %v1591
    %v1635 = vpack.c.b16 %v1594, %v1593
    %v1636 = vpack.c.b16 %v1596, %v1595
    %v1637 = vpack.c.b16 %v1598, %v1597
    %v1638 = vpack.c.b16 %v1600, %v1599
    %v1639 = vpack.c.b16 %v1602, %v1601
    %v1640 = vpack.c.b16 %v1604, %v1603
    %v1641 = vpack.c.b16 %v1606, %v1605
    %v1642 = vpack.c.b16 %v1608, %v1607
    %v1643 = vpack.c.b16 %v1610, %v1609
    %v1644 = vpack.c.b16 %v1612, %v1611
    %v1645 = vpack.c.b16 %v1614, %v1613
    %v1646 = vpack.c.b16 %v1616, %v1615
    %v1647 = vpack.c.b16 %v1618, %v1617
    %v1648 = vpack.c.b16 %v1620, %v1619
    %v1649 = vpack.c.b16 %v1622, %v1621
    %v1650 = vpack.c.b16 %v1624, %v1623
    %v1651 = vpack.c.b16 %v1626, %v1625
    %v1652 = vpack.c.b16 %v1628, %v1627
    %1677 = vmatpush.bf16.msra.mxu0 %v1636
    %1678 = vmatpush.bf16.msra.mxu0 %v1635
    %1679 = vmatpush.bf16.msra.mxu0 %v1634
    %1680 = vmatpush.bf16.msra.mxu0 %v1633
    %1681 = vmatpush.bf16.msra.mxu0 %v1632
    %1682 = vmatpush.bf16.msra.mxu0 %v1631
    %1683 = vmatpush.bf16.msra.mxu0 %v1630
    %1684 = vmatpush.bf16.msra.mxu0 %v1629
    %1685 = vmatmul.bf16.gmra.mxu0 %v1469
    %v1686 = vpop.f32.mrf.mxu0
    %v1687 = vadd.f32 %v1531, %v1686
    %v1688 = vpop.f32.mrf.mxu0
    %v1689 = vadd.f32 %v1531, %v1688
    %1690 = vmatmul.bf16.gmra.mxu0 %v1472
    %v1691 = vpop.f32.mrf.mxu0
    %v1692 = vadd.f32 %v1531, %v1691
    %v1693 = vpop.f32.mrf.mxu0
    %v1694 = vadd.f32 %v1531, %v1693
    %1695 = vmatmul.bf16.gmra.mxu0 %v1475
    %v1696 = vpop.f32.mrf.mxu0
    %v1697 = vadd.f32 %v1531, %v1696
    %v1698 = vpop.f32.mrf.mxu0
    %v1699 = vadd.f32 %v1531, %v1698
    %1700 = vmatmul.bf16.gmra.mxu0 %v1478
    %v1701 = vpop.f32.mrf.mxu0
    %v1702 = vadd.f32 %v1531, %v1701
    %v1703 = vpop.f32.mrf.mxu0
    %v1704 = vadd.f32 %v1531, %v1703
    %1705 = vdwg.mxu0
    %1706 = vmatpush.bf16.msra.mxu0 %v1644
    %1707 = vmatpush.bf16.msra.mxu0 %v1643
    %1708 = vmatpush.bf16.msra.mxu0 %v1642
    %1709 = vmatpush.bf16.msra.mxu0 %v1641
    %1710 = vmatpush.bf16.msra.mxu0 %v1640
    %1711 = vmatpush.bf16.msra.mxu0 %v1639
    %1712 = vmatpush.bf16.msra.mxu0 %v1638
    %1713 = vmatpush.bf16.msra.mxu0 %v1637
    %1714 = vmatmul.bf16.gmra.mxu0 %v1470
    %v1715 = vpop.f32.mrf.mxu0
    %v1716 = vadd.f32 %v1687, %v1715
    %v1717 = vpop.f32.mrf.mxu0
    %v1718 = vadd.f32 %v1689, %v1717
    %1719 = vmatmul.bf16.gmra.mxu0 %v1473
    %v1720 = vpop.f32.mrf.mxu0
    %v1721 = vadd.f32 %v1692, %v1720
    %v1722 = vpop.f32.mrf.mxu0
    %v1723 = vadd.f32 %v1694, %v1722
    %1724 = vmatmul.bf16.gmra.mxu0 %v1476
    %v1725 = vpop.f32.mrf.mxu0
    %v1726 = vadd.f32 %v1697, %v1725
    %v1727 = vpop.f32.mrf.mxu0
    %v1728 = vadd.f32 %v1699, %v1727
    %1729 = vmatmul.bf16.gmra.mxu0 %v1479
    %v1730 = vpop.f32.mrf.mxu0
    %v1731 = vadd.f32 %v1702, %v1730
    %v1732 = vpop.f32.mrf.mxu0
    %v1733 = vadd.f32 %v1704, %v1732
    %1734 = vdwg.mxu0
    %1735 = vmatpush.bf16.msra.mxu0 %v1652
    %1736 = vmatpush.bf16.msra.mxu0 %v1651
    %1737 = vmatpush.bf16.msra.mxu0 %v1650
    %1738 = vmatpush.bf16.msra.mxu0 %v1649
    %1739 = vmatpush.bf16.msra.mxu0 %v1648
    %1740 = vmatpush.bf16.msra.mxu0 %v1647
    %1741 = vmatpush.bf16.msra.mxu0 %v1646
    %1742 = vmatpush.bf16.msra.mxu0 %v1645
    %1743 = vmatmul.bf16.gmra.mxu0 %v1471
    %v1744 = vpop.f32.mrf.mxu0
    %v1745 = vadd.f32 %v1716, %v1744
    %v1746 = vpop.f32.mrf.mxu0
    %v1747 = vadd.f32 %v1718, %v1746
    %1748 = vmatmul.bf16.gmra.mxu0 %v1474
    %v1749 = vpop.f32.mrf.mxu0
    %v1750 = vadd.f32 %v1721, %v1749
    %v1751 = vpop.f32.mrf.mxu0
    %v1752 = vadd.f32 %v1723, %v1751
    %1753 = vmatmul.bf16.gmra.mxu0 %v1477
    %v1754 = vpop.f32.mrf.mxu0
    %v1755 = vadd.f32 %v1726, %v1754
    %v1756 = vpop.f32.mrf.mxu0
    %v1757 = vadd.f32 %v1728, %v1756
    %1758 = vmatmul.bf16.gmra.mxu0 %v1480
    %v1759 = vpop.f32.mrf.mxu0
    %v1760 = vadd.f32 %v1731, %v1759
    %v1761 = vpop.f32.mrf.mxu0
    %v1762 = vadd.f32 %v1733, %v1761
    %1763 = vdwg.mxu0
    %1764 = vst [vmem:[%s9] sm:$0xff] %v1745
    %1765 = vst [vmem:[%s9 + $0x8] sm:$0xff] %v1747
    %1766 = vst [vmem:[%s9 + $0x10] sm:$0xff] %v1750
    %1767 = vst [vmem:[%s9 + $0x18] sm:$0xff] %v1752
    %1768 = vst [vmem:[%s9 + $0x20] sm:$0xff] %v1755
    %1769 = vst [vmem:[%s9 + $0x28] sm:$0xff] %v1757
    %1770 = vst [vmem:[%s9 + $0x30] sm:$0xff] %v1760
    %1771 = vst [vmem:[%s9 + $0x38] sm:$0xff] %v1762
    // Predicated region
    $region46: #{_critic_forward.1} parent=1 // pred_check
      _
    $region47: #{_critic_forward.1} parent=1 // pred_check_branch
      %1773 = sbr.rel (0) target = $region49
    $region48: #{_critic_forward.1} parent=1 // pred_region
      _
    $region49: #{_critic_forward.1} parent=1 // pred_fallthru
      _
    // Predicated region
    $region50: #{_critic_forward.1} parent=1 // pred_check
      _
    $region51: #{_critic_forward.1} parent=1 // pred_check_branch
      %1775 = sbr.rel (0) target = $region53
    $region52: #{_critic_forward.1} parent=1 // pred_region
      _
    $region53: #{_critic_forward.1} parent=1 // pred_fallthru
      _
    %1776 = vsyncpa [#allocation3], 1
    %1777 = vsyncpa [#allocation5], 1

</llo_original>
